<compile_context>
chip_gen: v5e
topology: v5e:2x2
jax: 0.10.0
libtpu: 0.0.40
codegen_flags: <defaults>
</compile_context>

<pallas_src>
import jax
import jax.numpy as jnp
from jax import lax
from jax.experimental import pallas as pl
from jax.experimental.pallas import tpu as pltpu


def _log_sigmoid(x):
    # numerically stable log(sigmoid(x)) using VPU/EUP-friendly elementwise ops
    return jnp.minimum(x, 0.0) - jnp.log1p(jnp.exp(-jnp.abs(x)))


def _round_up(x, m):
    return (x + m - 1) // m * m


def _pad_axis(x, axis, target, value=0.0):
    pad = target - x.shape[axis]
    if pad <= 0:
        return x
    widths = [(0, 0)] * x.ndim
    widths[axis] = (0, pad)
    return jnp.pad(x, widths, constant_values=value)


def kge_loss_kernel(h_ref, r_ref, t_ref, tbias_ref, neg_ref, nbias_ref,
                    out_ref, acc_ref):
    """Negative-sampling KGE loss, one (batch-tile, negative-chunk) grid step.

    h_ref     : (tb, E)  bf16  head embeddings tile
    r_ref     : (1,  E)  bf16  relation vector
    t_ref     : (tb, E)  bf16  positive tail embeddings tile
    tbias_ref : (1, tb)  f32   relation bias at positive tails (lane-dense)
    neg_ref   : (tn, E)  bf16  negative tail embeddings chunk
    nbias_ref : (1, tn)  f32   relation bias at negative tails (lane-dense)
    out_ref   : (1, tb)  f32   per-example loss (lane-dense)
    acc_ref   : (1, tb)  f32   VMEM accumulator (resident across neg chunks)
    """
    k = pl.program_id(1)
    f32 = jnp.float32

    # ex = head + relation; math in f32 on the VPU (inputs arrive as bf16)
    ex32 = h_ref[...].astype(f32) + r_ref[...].astype(f32)             # (tb, E)

    @pl.when(k == 0)
    def _init():
        # positive logits: elementwise mul + lane reduction, stored lane-dense
        pos = jnp.sum(ex32 * t_ref[...].astype(f32), axis=1)           # (tb,)
        pos_logit = pos[None, :] + tbias_ref[...]                      # (1, tb)
        acc_ref[...] = -_log_sigmoid(pos_logit)

    # negative logits for this chunk: bf16 MXU matmul with f32 accumulation
    neg_logits = lax.dot_general(
        ex32.astype(jnp.bfloat16), neg_ref[...],
        dimension_numbers=(((1,), (1,)), ((), ())),
        preferred_element_type=f32,
    ) + nbias_ref[...]                                                 # (tb, tn)

    neg_loss = jnp.sum(-_log_sigmoid(-neg_logits), axis=1)             # (tb,)
    acc_ref[...] += neg_loss[None, :]                                  # (1, tb)

    @pl.when(k == pl.num_programs(1) - 1)
    def _finalize():
        out_ref[...] = acc_ref[...]


@jax.jit
def kge_neg_sampling_loss(head_vecs, rel_vec, tail_vecs, tail_bias,
                          neg_vecs, neg_bias):
    """Mean negative-sampling KGE loss.

    head_vecs : (B, E) f32    rel_vec  : (1, E) f32   tail_vecs : (B, E) f32
    tail_bias : (B,)   f32    neg_vecs : (N, E) f32   neg_bias  : (N,)   f32
    """
    B, E = head_vecs.shape
    N = neg_vecs.shape[0]

    # lane-aligned padded sizes
    Ep = _round_up(E, 128)
    Bp = _round_up(B, 128)
    Np = _round_up(N, 128)

    # tiles: big batch tile for MXU M-dim, modest resident negative chunk
    tb = 256 if Bp % 256 == 0 else 128
    tn = next(c for c in (1024, 512, 256, 128) if Np % c == 0)

    bf16 = jnp.bfloat16
    h = _pad_axis(_pad_axis(head_vecs.astype(bf16), 1, Ep), 0, Bp)      # (Bp, Ep)
    r = _pad_axis(rel_vec.astype(bf16), 1, Ep)                          # (1,  Ep)
    t = _pad_axis(_pad_axis(tail_vecs.astype(bf16), 1, Ep), 0, Bp)      # (Bp, Ep)
    n = _pad_axis(_pad_axis(neg_vecs.astype(bf16), 1, Ep), 0, Np)       # (Np, Ep)
    # lane-dense bias rows; padded negatives masked via a very negative bias
    # (log_sigmoid(+1e9) == 0 exactly, so they contribute nothing to the loss).
    tbias = _pad_axis(tail_bias.astype(jnp.float32).reshape(1, B), 1, Bp)
    nbias = _pad_axis(neg_bias.astype(jnp.float32).reshape(1, N), 1, Np, value=-1e9)

    grid = (Bp // tb, Np // tn)

    flops = 2 * Bp * Np * Ep + 4 * Bp * Ep + 8 * Bp * Np
    transcendentals = 2 * Bp * (Np + 1)
    bytes_accessed = 2 * (h.size + r.size + t.size + n.size) \
        + 4 * (tbias.size + nbias.size + Bp)

    per_example = pl.pallas_call(
        kge_loss_kernel,
        out_shape=jax.ShapeDtypeStruct((1, Bp), jnp.float32),
        grid_spec=pltpu.PrefetchScalarGridSpec(
            num_scalar_prefetch=0,
            grid=grid,
            in_specs=[
                pl.BlockSpec((tb, Ep), lambda i, k: (i, 0)),   # head tile
                pl.BlockSpec((1, Ep), lambda i, k: (0, 0)),    # relation vec
                pl.BlockSpec((tb, Ep), lambda i, k: (i, 0)),   # pos tail tile
                pl.BlockSpec((1, tb), lambda i, k: (0, i)),    # pos tail bias
                pl.BlockSpec((tn, Ep), lambda i, k: (k, 0)),   # neg chunk
                pl.BlockSpec((1, tn), lambda i, k: (0, k)),    # neg bias chunk
            ],
            out_specs=pl.BlockSpec((1, tb), lambda i, k: (0, i)),
            scratch_shapes=[pltpu.VMEM((1, tb), jnp.float32)],
        ),
        compiler_params=pltpu.CompilerParams(
            # batch tiles independent -> parallel (2 TCs on v7x);
            # negative chunks accumulate into the same output block -> arbitrary, last.
            dimension_semantics=("parallel", "arbitrary"),
            # explicit scoped-VMEM budget with headroom for v7x (64 MiB physical).
            vmem_limit_bytes=48 * 1024 * 1024,
        ),
        cost_estimate=pl.CostEstimate(
            flops=int(flops),
            transcendentals=int(transcendentals),
            bytes_accessed=int(bytes_accessed),
        ),
    )(h, r, t, tbias, n, nbias)

    # drop padded batch lanes, then mean (tiny reduce)
    return jnp.mean(per_example[0, :B])


# ---------------------------------------------------------------------------
# Parameter construction mirroring KnowledgeGraphEmbedding.__init__ shapes
# ---------------------------------------------------------------------------

def make_entity_embedding(key, vocab_size, embed_size):
    """[vocab_size + 1, embed_size]; last row is always 0's."""
    w = jax.random.uniform(key, (vocab_size + 1, embed_size),
                           minval=-1.0, maxval=1.0, dtype=jnp.float32)
    w = w / jnp.sqrt(jnp.float32(embed_size))
    return w.at[-1, :].set(0.0)


def make_relation_embedding(key, embed_size):
    """[1, embed_size]."""
    w = jax.random.uniform(key, (1, embed_size),
                           minval=-1.0, maxval=1.0, dtype=jnp.float32)
    return w / jnp.sqrt(jnp.float32(embed_size))


def make_relation_bias(vocab_size):
    """[vocab_size + 1] (zero-initialized, as in the reference implementations)."""
    return jnp.zeros((vocab_size + 1,), dtype=jnp.float32)


if __name__ == "__main__":
    # small shapes: embed_size=64 (padded to 128 inside wrapper), num_neg=128, batch=8
    embed_size = 64
    num_neg_samples = 128
    batch = 8

    user_vocab = 24      # head entity type ("user")
    product_vocab = 40   # tail entity type ("product"), main interaction relation

    key = jax.random.PRNGKey(0)
    k_user, k_prod, k_rel, k_h, k_t, k_neg = jax.random.split(key, 6)

    user_embed = make_entity_embedding(k_user, user_vocab, embed_size)        # (25, 64)
    product_embed = make_entity_embedding(k_prod, product_vocab, embed_size)  # (41, 64)
    watched_rel = make_relation_embedding(k_rel, embed_size)                  # (1, 64)
    watched_bias = make_relation_bias(product_vocab)                          # (41,)
    # TODO(synk): _make_distrib (negative-sampling distribution normalization) is
    # host-side numpy preprocessing; negative indices are drawn deterministically here.

    head_idxs = jax.random.randint(k_h, (batch,), 0, user_vocab)
    tail_idxs = jax.random.randint(k_t, (batch,), 0, product_vocab)
    neg_idxs = jax.random.randint(k_neg, (num_neg_samples,), 0, product_vocab)

    # glue: embedding gathers in plain JAX.
    # TODO(synk): at production scale move the gather in-kernel (tables with
    # memory_space=pl.ANY + PrefetchScalarGridSpec index prefetch + make_async_copy).
    head_vecs = user_embed[head_idxs]                         # (B, E)
    tail_vecs = product_embed[tail_idxs]                      # (B, E)
    tail_bias = watched_bias[tail_idxs]                       # (B,)
    neg_vecs = product_embed[neg_idxs]                        # (N, E)
    neg_bias = watched_bias[neg_idxs]                         # (N,)

    loss = kge_neg_sampling_loss(head_vecs, watched_rel, tail_vecs,
                                 tail_bias, neg_vecs, neg_bias)
    loss = jax.block_until_ready(loss)

    # pure-JAX reference with matching bf16 matmul quantization / f32 accumulation
    bf16 = jnp.bfloat16
    h_q = head_vecs.astype(bf16).astype(jnp.float32)
    r_q = watched_rel.astype(bf16).astype(jnp.float32)
    t_q = tail_vecs.astype(bf16).astype(jnp.float32)
    n_q = neg_vecs.astype(bf16)
    ex = h_q + r_q
    pos = jnp.sum(ex * t_q, axis=1) + tail_bias
    negl = jnp.dot(ex.astype(bf16), n_q.T,
                   preferred_element_type=jnp.float32) + neg_bias[None, :]
    ref = jnp.mean(-_log_sigmoid(pos) - jnp.sum(_log_sigmoid(-negl), axis=1))

    assert jnp.allclose(loss, ref, rtol=2e-3, atol=2e-3), (loss, ref)
    print("KERNEL_OK")
</pallas_src>

<mosaic_0001>
module attributes {stable_mosaic.version = 11 : i64} {
  func.func @kge_loss_kernel(%arg0: i32, %arg1: i32, %arg2: memref<128x128xbf16, #tpu.memory_space<vmem>>, %arg3: memref<1x128xbf16, #tpu.memory_space<vmem>>, %arg4: memref<128x128xbf16, #tpu.memory_space<vmem>>, %arg5: memref<1x128xf32, #tpu.memory_space<vmem>>, %arg6: memref<128x128xbf16, #tpu.memory_space<vmem>>, %arg7: memref<1x128xf32, #tpu.memory_space<vmem>>, %arg8: memref<1x128xf32, #tpu.memory_space<vmem>>, %arg9: memref<1x128xf32, #tpu.memory_space<vmem>>) attributes {dimension_semantics = [#tpu.dimension_semantics<parallel>, #tpu.dimension_semantics<arbitrary>], iteration_bounds = array<i64: 1, 1>, scalar_prefetch = 0 : i64, scratch_operands = 1 : i64, tpu.core_type = #tpu.core_type<tc>, window_params = [{transform_indices = @transform_0, window_bounds = array<i64: 128, 128>}, {pipeline_mode = #tpu.pipeline_mode<synchronous>, transform_indices = @transform_1, window_bounds = array<i64: 1, 128>}, {transform_indices = @transform_2, window_bounds = array<i64: 128, 128>}, {transform_indices = @transform_3, window_bounds = array<i64: 1, 128>}, {transform_indices = @transform_4, window_bounds = array<i64: 128, 128>}, {transform_indices = @transform_5, window_bounds = array<i64: 1, 128>}, {transform_indices = @transform_6, window_bounds = array<i64: 1, 128>}]} {
    %c0 = arith.constant 0 : index
    %c0_0 = arith.constant 0 : index
    %0 = vector.load %arg2[%c0, %c0_0] : memref<128x128xbf16, #tpu.memory_space<vmem>>, vector<128x128xbf16>
    %1 = arith.extf %0 : vector<128x128xbf16> to vector<128x128xf32>
    %c0_1 = arith.constant 0 : index
    %c0_2 = arith.constant 0 : index
    %2 = vector.load %arg3[%c0_1, %c0_2] : memref<1x128xbf16, #tpu.memory_space<vmem>>, vector<1x128xbf16>
    %3 = arith.extf %2 : vector<1x128xbf16> to vector<1x128xf32>
    %4 = vector.broadcast %3 : vector<1x128xf32> to vector<128x128xf32>
    %5 = arith.addf %1, %4 : vector<128x128xf32>
    %c0_i32 = arith.constant 0 : i32
    %6 = arith.cmpi eq, %arg1, %c0_i32 : i32
    %7 = arith.extui %6 : i1 to i32
    %c0_i32_3 = arith.constant 0 : i32
    %8 = arith.cmpi ne, %7, %c0_i32_3 : i32
    scf.if %8 {
      %c0_19 = arith.constant 0 : index
      %c0_20 = arith.constant 0 : index
      %35 = vector.load %arg4[%c0_19, %c0_20] : memref<128x128xbf16, #tpu.memory_space<vmem>>, vector<128x128xbf16>
      %36 = arith.extf %35 : vector<128x128xbf16> to vector<128x128xf32>
      %37 = arith.mulf %5, %36 : vector<128x128xf32>
      %cst_21 = arith.constant dense<0.000000e+00> : vector<128xf32>
      %38 = vector.multi_reduction <add>, %37, %cst_21 [1] : vector<128x128xf32> to vector<128xf32>
      %39 = vector.shape_cast %38 : vector<128xf32> to vector<1x128xf32>
      %c0_22 = arith.constant 0 : index
      %c0_23 = arith.constant 0 : index
      %40 = vector.load %arg5[%c0_22, %c0_23] : memref<1x128xf32, #tpu.memory_space<vmem>>, vector<1x128xf32>
      %41 = arith.addf %39, %40 : vector<1x128xf32>
      %cst_24 = arith.constant 0.000000e+00 : f32
      %42 = vector.broadcast %cst_24 : f32 to vector<1x128xf32>
      %43 = arith.minimumf %41, %42 : vector<1x128xf32>
      %44 = math.absf %41 : vector<1x128xf32>
      %cst_25 = arith.constant 0.000000e+00 : f32
      %45 = vector.broadcast %cst_25 : f32 to vector<1x128xf32>
      %46 = arith.subf %45, %44 : vector<1x128xf32>
      %47 = math.exp %46 : vector<1x128xf32>
      %48 = math.log1p %47 : vector<1x128xf32>
      %49 = arith.subf %43, %48 : vector<1x128xf32>
      %cst_26 = arith.constant 0.000000e+00 : f32
      %50 = vector.broadcast %cst_26 : f32 to vector<1x128xf32>
      %51 = arith.subf %50, %49 : vector<1x128xf32>
      %c0_27 = arith.constant 0 : index
      %c0_28 = arith.constant 0 : index
      %52 = vector.load %arg9[%c0_27, %c0_28] : memref<1x128xf32, #tpu.memory_space<vmem>>, vector<1x128xf32>
      tpu.vector_store %arg9[%c0_27, %c0_28], %51 {strides = array<i32>} : memref<1x128xf32, #tpu.memory_space<vmem>>, vector<1x128xf32>,
    } else {
    }
    %9 = arith.truncf %5 : vector<128x128xf32> to vector<128x128xbf16>
    %c0_4 = arith.constant 0 : index
    %c0_5 = arith.constant 0 : index
    %10 = vector.load %arg6[%c0_4, %c0_5] : memref<128x128xbf16, #tpu.memory_space<vmem>>, vector<128x128xbf16>
    %cst = arith.constant dense<0.000000e+00> : vector<128x128xf32>
    %11 = tpu.matmul %9, %10, %cst {dimension_numbers = #tpu.dot_dimension_numbers<[1], [1], [0], [0], [0, 0, 1, 0], [], []>} : vector<128x128xbf16>, vector<128x128xbf16>, vector<128x128xf32> -> vector<128x128xf32>
    %c0_6 = arith.constant 0 : index
    %c0_7 = arith.constant 0 : index
    %12 = vector.load %arg7[%c0_6, %c0_7] : memref<1x128xf32, #tpu.memory_space<vmem>>, vector<1x128xf32>
    %13 = vector.broadcast %12 : vector<1x128xf32> to vector<128x128xf32>
    %14 = arith.addf %11, %13 : vector<128x128xf32>
    %cst_8 = arith.constant 0.000000e+00 : f32
    %15 = vector.broadcast %cst_8 : f32 to vector<128x128xf32>
    %16 = arith.subf %15, %14 : vector<128x128xf32>
    %cst_9 = arith.constant 0.000000e+00 : f32
    %17 = vector.broadcast %cst_9 : f32 to vector<128x128xf32>
    %18 = arith.minimumf %16, %17 : vector<128x128xf32>
    %19 = math.absf %16 : vector<128x128xf32>
    %cst_10 = arith.constant 0.000000e+00 : f32
    %20 = vector.broadcast %cst_10 : f32 to vector<128x128xf32>
    %21 = arith.subf %20, %19 : vector<128x128xf32>
    %22 = math.exp %21 : vector<128x128xf32>
    %23 = math.log1p %22 : vector<128x128xf32>
    %24 = arith.subf %18, %23 : vector<128x128xf32>
    %cst_11 = arith.constant 0.000000e+00 : f32
    %25 = vector.broadcast %cst_11 : f32 to vector<128x128xf32>
    %26 = arith.subf %25, %24 : vector<128x128xf32>
    %cst_12 = arith.constant dense<0.000000e+00> : vector<128xf32>
    %27 = vector.multi_reduction <add>, %26, %cst_12 [1] : vector<128x128xf32> to vector<128xf32>
    %c0_13 = arith.constant 0 : index
    %c0_14 = arith.constant 0 : index
    %28 = vector.load %arg9[%c0_13, %c0_14] : memref<1x128xf32, #tpu.memory_space<vmem>>, vector<1x128xf32>
    %29 = vector.shape_cast %27 : vector<128xf32> to vector<1x128xf32>
    %30 = arith.addf %28, %29 : vector<1x128xf32>
    %c0_15 = arith.constant 0 : index
    %c0_16 = arith.constant 0 : index
    %31 = vector.load %arg9[%c0_15, %c0_16] : memref<1x128xf32, #tpu.memory_space<vmem>>, vector<1x128xf32>
    tpu.vector_store %arg9[%c0_15, %c0_16], %30 {strides = array<i32>} : memref<1x128xf32, #tpu.memory_space<vmem>>, vector<1x128xf32>,
    %c0_i32_17 = arith.constant 0 : i32
    %32 = arith.cmpi eq, %arg1, %c0_i32_17 : i32
    %33 = arith.extui %32 : i1 to i32
    %c0_i32_18 = arith.constant 0 : i32
    %34 = arith.cmpi ne, %33, %c0_i32_18 : i32
    scf.if %34 {
      %c0_19 = arith.constant 0 : index
      %c0_20 = arith.constant 0 : index
      %35 = vector.load %arg9[%c0_19, %c0_20] : memref<1x128xf32, #tpu.memory_space<vmem>>, vector<1x128xf32>
      %c0_21 = arith.constant 0 : index
      %c0_22 = arith.constant 0 : index
      %36 = vector.load %arg8[%c0_21, %c0_22] : memref<1x128xf32, #tpu.memory_space<vmem>>, vector<1x128xf32>
      tpu.vector_store %arg8[%c0_21, %c0_22], %35 {strides = array<i32>} : memref<1x128xf32, #tpu.memory_space<vmem>>, vector<1x128xf32>,
    } else {
    }
    return
  }
  func.func @transform_0(%arg0: i32, %arg1: i32) -> (i32, i32) {
    %c0_i32 = arith.constant 0 : i32
    %c0_i32_0 = arith.constant 0 : i32
    return %arg0, %c0_i32 : i32, i32
  }
  func.func @transform_1(%arg0: i32, %arg1: i32) -> (i32, i32) {
    %c0_i32 = arith.constant 0 : i32
    %c0_i32_0 = arith.constant 0 : i32
    %c0_i32_1 = arith.constant 0 : i32
    return %c0_i32, %c0_i32_0 : i32, i32
  }
  func.func @transform_2(%arg0: i32, %arg1: i32) -> (i32, i32) {
    %c0_i32 = arith.constant 0 : i32
    %c0_i32_0 = arith.constant 0 : i32
    return %arg0, %c0_i32 : i32, i32
  }
  func.func @transform_3(%arg0: i32, %arg1: i32) -> (i32, i32) {
    %c0_i32 = arith.constant 0 : i32
    %c0_i32_0 = arith.constant 0 : i32
    return %c0_i32, %arg0 : i32, i32
  }
  func.func @transform_4(%arg0: i32, %arg1: i32) -> (i32, i32) {
    %c0_i32 = arith.constant 0 : i32
    %c0_i32_0 = arith.constant 0 : i32
    return %arg1, %c0_i32 : i32, i32
  }
  func.func @transform_5(%arg0: i32, %arg1: i32) -> (i32, i32) {
    %c0_i32 = arith.constant 0 : i32
    %c0_i32_0 = arith.constant 0 : i32
    return %c0_i32, %arg1 : i32, i32
  }
  func.func @transform_6(%arg0: i32, %arg1: i32) -> (i32, i32) {
    %c0_i32 = arith.constant 0 : i32
    %c0_i32_0 = arith.constant 0 : i32
    return %c0_i32, %arg0 : i32, i32
  }
}

</mosaic_0001>

<llo_original>
// kernel: kge_neg_sampling_loss.1
$region0: #{kge_neg_sampling_loss.1}
  #allocation0 [shape = 'u32[]', space=smem, size = 0x4, offset = 0x4, fixed_abs, tag = 'smem constant byte address 0x4 - core index']
  #allocation1 [shape = 'u32[72,128]{1,0:T(1,128)}', space=vmem, size = 0x9000, scoped, tag = 'internal scratch']
  #allocation2 [shape = 'f32[1,128]{1,0:T(1,128)}', space=vmem, size = 0x200, scoped, tag = 'scratch operand']
  %s0 = inlined_call_operand.vmem [shape: bf16[128,128], index: 0, kind: input, shape index: {}]
  %s1 = inlined_call_operand.vmem [shape: bf16[1,128], index: 1, kind: input, shape index: {}]
  %s2 = inlined_call_operand.vmem [shape: bf16[128,128], index: 2, kind: input, shape index: {}]
  %s3 = inlined_call_operand.vmem [shape: f32[1,128], index: 3, kind: input, shape index: {}]
  %s4 = inlined_call_operand.vmem [shape: bf16[128,128], index: 4, kind: input, shape index: {}]
  %s5 = inlined_call_operand.vmem [shape: f32[1,128], index: 5, kind: input, shape index: {}]
  %s6 = inlined_call_operand.vmem [shape: f32[1,128], index: 6, kind: output, shape index: {}]
  %s7 = sld [smem:[#allocation0]]
  $region42: #{kge_neg_sampling_loss.1} parent=0
    _
  %s9 = ssub.s32 1, %s7
  %s10 = scalar_select 0, %s9, %s7
  // Predicated region
  $region2: #{kge_neg_sampling_loss.1} parent=0 // pred_check
    _
  $region3: #{kge_neg_sampling_loss.1} parent=0 // pred_check_branch
    %12 = sbr.rel (0) target = $region5
  $region4: #{kge_neg_sampling_loss.1} parent=0 // pred_region
    _
  $region5: #{kge_neg_sampling_loss.1} parent=0 // pred_fallthru
    _
  // Predicated region
  $region6: #{kge_neg_sampling_loss.1} parent=0 // pred_check
    _
  $region7: #{kge_neg_sampling_loss.1} parent=0 // pred_check_branch
    %14 = sbr.rel (0) target = $region9
  $region8: #{kge_neg_sampling_loss.1} parent=0 // pred_region
    _
  $region9: #{kge_neg_sampling_loss.1} parent=0 // pred_fallthru
    _
  // Predicated region
  $region10: #{kge_neg_sampling_loss.1} parent=0 // pred_check
    _
  $region11: #{kge_neg_sampling_loss.1} parent=0 // pred_check_branch
    %16 = sbr.rel (0) target = $region13
  $region12: #{kge_neg_sampling_loss.1} parent=0 // pred_region
    _
  $region13: #{kge_neg_sampling_loss.1} parent=0 // pred_fallthru
    _
  // Predicated region
  $region14: #{kge_neg_sampling_loss.1} parent=0 // pred_check
    _
  $region15: #{kge_neg_sampling_loss.1} parent=0 // pred_check_branch
    %18 = sbr.rel (0) target = $region17
  $region16: #{kge_neg_sampling_loss.1} parent=0 // pred_region
    _
  $region17: #{kge_neg_sampling_loss.1} parent=0 // pred_fallthru
    _
  // Predicated region
  $region18: #{kge_neg_sampling_loss.1} parent=0 // pred_check
    _
  $region19: #{kge_neg_sampling_loss.1} parent=0 // pred_check_branch
    %20 = sbr.rel (0) target = $region21
  $region20: #{kge_neg_sampling_loss.1} parent=0 // pred_region
    _
  $region21: #{kge_neg_sampling_loss.1} parent=0 // pred_fallthru
    _
  // Predicated region
  $region22: #{kge_neg_sampling_loss.1} parent=0 // pred_check
    _
  $region23: #{kge_neg_sampling_loss.1} parent=0 // pred_check_branch
    %22 = sbr.rel (0) target = $region25
  $region24: #{kge_neg_sampling_loss.1} parent=0 // pred_region
    _
  $region25: #{kge_neg_sampling_loss.1} parent=0 // pred_fallthru
    _
  %v23 = vld [vmem:[%s0] sm:$0xf]
  %v24 = vld [vmem:[%s0 + $0x4] sm:$0xf]
  %v25 = vld [vmem:[%s0 + $0x8] sm:$0xf]
  %v26 = vld [vmem:[%s0 + $0xc] sm:$0xf]
  %v27 = vld [vmem:[%s0 + $0x10] sm:$0xf]
  %v28 = vld [vmem:[%s0 + $0x14] sm:$0xf]
  %v29 = vld [vmem:[%s0 + $0x18] sm:$0xf]
  %v30 = vld [vmem:[%s0 + $0x1c] sm:$0xf]
  %v31 = vld [vmem:[%s0 + $0x20] sm:$0xf]
  %v32 = vld [vmem:[%s0 + $0x24] sm:$0xf]
  %v33 = vld [vmem:[%s0 + $0x28] sm:$0xf]
  %v34 = vld [vmem:[%s0 + $0x2c] sm:$0xf]
  %v35 = vld [vmem:[%s0 + $0x30] sm:$0xf]
  %v36 = vld [vmem:[%s0 + $0x34] sm:$0xf]
  %v37 = vld [vmem:[%s0 + $0x38] sm:$0xf]
  %v38 = vld [vmem:[%s0 + $0x3c] sm:$0xf]
  %v39 = vunpack.c.l.bf16 %v23
  %v40 = vunpack.c.l.bf16 %v24
  %v41 = vunpack.c.l.bf16 %v25
  %v42 = vunpack.c.l.bf16 %v26
  %v43 = vunpack.c.l.bf16 %v27
  %v44 = vunpack.c.l.bf16 %v28
  %v45 = vunpack.c.l.bf16 %v29
  %v46 = vunpack.c.l.bf16 %v30
  %v47 = vunpack.c.l.bf16 %v31
  %v48 = vunpack.c.l.bf16 %v32
  %v49 = vunpack.c.l.bf16 %v33
  %v50 = vunpack.c.l.bf16 %v34
  %v51 = vunpack.c.l.bf16 %v35
  %v52 = vunpack.c.l.bf16 %v36
  %v53 = vunpack.c.l.bf16 %v37
  %v54 = vunpack.c.l.bf16 %v38
  %v55 = vld [vmem:[%s1] sm:$0x1]
  %v56 = vunpack.c.l.bf16 %v55
  %v57 = vperm.slane %v56, 0
  %v58 = vadd.f32 %v39, %v57
  %v59 = vadd.f32 %v40, %v57
  %v60 = vadd.f32 %v41, %v57
  %v61 = vadd.f32 %v42, %v57
  %v62 = vadd.f32 %v43, %v57
  %v63 = vadd.f32 %v44, %v57
  %v64 = vadd.f32 %v45, %v57
  %v65 = vadd.f32 %v46, %v57
  %v66 = vadd.f32 %v47, %v57
  %v67 = vadd.f32 %v48, %v57
  %v68 = vadd.f32 %v49, %v57
  %v69 = vadd.f32 %v50, %v57
  %v70 = vadd.f32 %v51, %v57
  %v71 = vadd.f32 %v52, %v57
  %v72 = vadd.f32 %v53, %v57
  %v73 = vadd.f32 %v54, %v57
  %p74 = scmp.eq.s32.totalorder 0, 0
  // Predicated region
  $region26: #{kge_neg_sampling_loss.1} parent=0 // pred_check
    %p75 = pneg %p74
  $region27: #{kge_neg_sampling_loss.1} parent=0 // pred_check_branch
    %77 = sbr.rel (%p75) target = $region29
  $region28: #{kge_neg_sampling_loss.1} parent=0 // pred_region
    %v78 = vld [vmem:[%s2] sm:$0xf]
    %v79 = vld [vmem:[%s2 + $0x4] sm:$0xf]
    %v80 = vld [vmem:[%s2 + $0x8] sm:$0xf]
    %v81 = vld [vmem:[%s2 + $0xc] sm:$0xf]
    %v82 = vld [vmem:[%s2 + $0x10] sm:$0xf]
    %v83 = vld [vmem:[%s2 + $0x14] sm:$0xf]
    %v84 = vld [vmem:[%s2 + $0x18] sm:$0xf]
    %v85 = vld [vmem:[%s2 + $0x1c] sm:$0xf]
    %v86 = vld [vmem:[%s2 + $0x20] sm:$0xf]
    %v87 = vld [vmem:[%s2 + $0x24] sm:$0xf]
    %v88 = vld [vmem:[%s2 + $0x28] sm:$0xf]
    %v89 = vld [vmem:[%s2 + $0x2c] sm:$0xf]
    %v90 = vld [vmem:[%s2 + $0x30] sm:$0xf]
    %v91 = vld [vmem:[%s2 + $0x34] sm:$0xf]
    %v92 = vld [vmem:[%s2 + $0x38] sm:$0xf]
    %v93 = vld [vmem:[%s2 + $0x3c] sm:$0xf]
    %v94 = vunpack.c.l.bf16 %v78
    %v95 = vunpack.c.l.bf16 %v79
    %v96 = vunpack.c.l.bf16 %v80
    %v97 = vunpack.c.l.bf16 %v81
    %v98 = vunpack.c.l.bf16 %v82
    %v99 = vunpack.c.l.bf16 %v83
    %v100 = vunpack.c.l.bf16 %v84
    %v101 = vunpack.c.l.bf16 %v85
    %v102 = vunpack.c.l.bf16 %v86
    %v103 = vunpack.c.l.bf16 %v87
    %v104 = vunpack.c.l.bf16 %v88
    %v105 = vunpack.c.l.bf16 %v89
    %v106 = vunpack.c.l.bf16 %v90
    %v107 = vunpack.c.l.bf16 %v91
    %v108 = vunpack.c.l.bf16 %v92
    %v109 = vunpack.c.l.bf16 %v93
    %v110 = vmul.f32 %v58, %v94
    %v111 = vmul.f32 %v59, %v95
    %v112 = vmul.f32 %v60, %v96
    %v113 = vmul.f32 %v61, %v97
    %v114 = vmul.f32 %v62, %v98
    %v115 = vmul.f32 %v63, %v99
    %v116 = vmul.f32 %v64, %v100
    %v117 = vmul.f32 %v65, %v101
    %v118 = vmul.f32 %v66, %v102
    %v119 = vmul.f32 %v67, %v103
    %v120 = vmul.f32 %v68, %v104
    %v121 = vmul.f32 %v69, %v105
    %v122 = vmul.f32 %v70, %v106
    %v123 = vmul.f32 %v71, %v107
    %v124 = vmul.f32 %v72, %v108
    %v125 = vmul.f32 %v73, %v109
    %126 = vadd.xlane.f32.xlu0 %v110
    %v127 = vpop.xlane.xlu0 %126
    %128 = vadd.xlane.f32.xlu0 %v111
    %v129 = vpop.xlane.xlu0 %128
    %130 = vadd.xlane.f32.xlu0 %v112
    %v131 = vpop.xlane.xlu0 %130
    %132 = vadd.xlane.f32.xlu0 %v113
    %v133 = vpop.xlane.xlu0 %132
    %134 = vadd.xlane.f32.xlu0 %v114
    %v135 = vpop.xlane.xlu0 %134
    %136 = vadd.xlane.f32.xlu0 %v115
    %v137 = vpop.xlane.xlu0 %136
    %138 = vadd.xlane.f32.xlu0 %v116
    %v139 = vpop.xlane.xlu0 %138
    %140 = vadd.xlane.f32.xlu0 %v117
    %v141 = vpop.xlane.xlu0 %140
    %142 = vadd.xlane.f32.xlu0 %v118
    %v143 = vpop.xlane.xlu0 %142
    %144 = vadd.xlane.f32.xlu0 %v119
    %v145 = vpop.xlane.xlu0 %144
    %146 = vadd.xlane.f32.xlu0 %v120
    %v147 = vpop.xlane.xlu0 %146
    %148 = vadd.xlane.f32.xlu0 %v121
    %v149 = vpop.xlane.xlu0 %148
    %150 = vadd.xlane.f32.xlu0 %v122
    %v151 = vpop.xlane.xlu0 %150
    %152 = vadd.xlane.f32.xlu0 %v123
    %v153 = vpop.xlane.xlu0 %152
    %154 = vadd.xlane.f32.xlu0 %v124
    %v155 = vpop.xlane.xlu0 %154
    %156 = vadd.xlane.f32.xlu0 %v125
    %v157 = vpop.xlane.xlu0 %156
    %v158 = vld [vmem:[%s3] sm:$0x1]
    %v160 = vperm.slane %v158, 0
    %v161 = vlaneseq
    %v162 = vshrl.u32 %v161, 7
    %164 = vset.pattern.permute.xlu0 %v162
    %165 = vperm.xlu0 %164, %v160
    %v166 = vpop.permute.xlu0 %165
    %v167 = vlaneseq
    %v168 = vshrl.u32 %v167, 7
    %v169 = vadd.s32 %v168, 8
    %170 = vset.pattern.permute.xlu0 %v169
    %171 = vperm.xlu0 %170, %v160
    %v172 = vpop.permute.xlu0 %171
    %v173 = vlaneseq
    %v174 = vshrl.u32 %v173, 7
    %v175 = vadd.s32 %v174, 16
    %176 = vset.pattern.permute.xlu0 %v175
    %177 = vperm.xlu0 %176, %v160
    %v178 = vpop.permute.xlu0 %177
    %v179 = vlaneseq
    %v180 = vshrl.u32 %v179, 7
    %v181 = vadd.s32 %v180, 24
    %182 = vset.pattern.permute.xlu0 %v181
    %183 = vperm.xlu0 %182, %v160
    %v184 = vpop.permute.xlu0 %183
    %v185 = vlaneseq
    %v186 = vshrl.u32 %v185, 7
    %v187 = vadd.s32 %v186, 32
    %188 = vset.pattern.permute.xlu0 %v187
    %189 = vperm.xlu0 %188, %v160
    %v190 = vpop.permute.xlu0 %189
    %v191 = vlaneseq
    %v192 = vshrl.u32 %v191, 7
    %v193 = vadd.s32 %v192, 40
    %194 = vset.pattern.permute.xlu0 %v193
    %195 = vperm.xlu0 %194, %v160
    %v196 = vpop.permute.xlu0 %195
    %v197 = vlaneseq
    %v198 = vshrl.u32 %v197, 7
    %v199 = vadd.s32 %v198, 48
    %200 = vset.pattern.permute.xlu0 %v199
    %201 = vperm.xlu0 %200, %v160
    %v202 = vpop.permute.xlu0 %201
    %v203 = vlaneseq
    %v204 = vshrl.u32 %v203, 7
    %v205 = vadd.s32 %v204, 56
    %206 = vset.pattern.permute.xlu0 %v205
    %207 = vperm.xlu0 %206, %v160
    %v208 = vpop.permute.xlu0 %207
    %v209 = vlaneseq
    %v210 = vshrl.u32 %v209, 7
    %v211 = vadd.s32 %v210, 64
    %212 = vset.pattern.permute.xlu0 %v211
    %213 = vperm.xlu0 %212, %v160
    %v214 = vpop.permute.xlu0 %213
    %v215 = vlaneseq
    %v216 = vshrl.u32 %v215, 7
    %v217 = vadd.s32 %v216, 72
    %218 = vset.pattern.permute.xlu0 %v217
    %219 = vperm.xlu0 %218, %v160
    %v220 = vpop.permute.xlu0 %219
    %v221 = vlaneseq
    %v222 = vshrl.u32 %v221, 7
    %v223 = vadd.s32 %v222, 80
    %224 = vset.pattern.permute.xlu0 %v223
    %225 = vperm.xlu0 %224, %v160
    %v226 = vpop.permute.xlu0 %225
    %v227 = vlaneseq
    %v228 = vshrl.u32 %v227, 7
    %v229 = vadd.s32 %v228, 88
    %230 = vset.pattern.permute.xlu0 %v229
    %231 = vperm.xlu0 %230, %v160
    %v232 = vpop.permute.xlu0 %231
    %v233 = vlaneseq
    %v234 = vshrl.u32 %v233, 7
    %v235 = vadd.s32 %v234, 96
    %236 = vset.pattern.permute.xlu0 %v235
    %237 = vperm.xlu0 %236, %v160
    %v238 = vpop.permute.xlu0 %237
    %v239 = vlaneseq
    %v240 = vshrl.u32 %v239, 7
    %v241 = vadd.s32 %v240, 104
    %242 = vset.pattern.permute.xlu0 %v241
    %243 = vperm.xlu0 %242, %v160
    %v244 = vpop.permute.xlu0 %243
    %v245 = vlaneseq
    %v246 = vshrl.u32 %v245, 7
    %v247 = vadd.s32 %v246, 112
    %248 = vset.pattern.permute.xlu0 %v247
    %249 = vperm.xlu0 %248, %v160
    %v250 = vpop.permute.xlu0 %249
    %v251 = vlaneseq
    %v252 = vshrl.u32 %v251, 7
    %v253 = vadd.s32 %v252, 120
    %254 = vset.pattern.permute.xlu0 %v253
    %255 = vperm.xlu0 %254, %v160
    %v256 = vpop.permute.xlu0 %255
    %v273 = vadd.f32 %v127, %v166
    %v274 = vadd.f32 %v129, %v172
    %v275 = vadd.f32 %v131, %v178
    %v276 = vadd.f32 %v133, %v184
    %v277 = vadd.f32 %v135, %v190
    %v278 = vadd.f32 %v137, %v196
    %v279 = vadd.f32 %v139, %v202
    %v280 = vadd.f32 %v141, %v208
    %v281 = vadd.f32 %v143, %v214
    %v282 = vadd.f32 %v145, %v220
    %v283 = vadd.f32 %v147, %v226
    %v284 = vadd.f32 %v149, %v232
    %v285 = vadd.f32 %v151, %v238
    %v286 = vadd.f32 %v153, %v244
    %v287 = vadd.f32 %v155, %v250
    %v288 = vadd.f32 %v157, %v256
    %v289 = vmin.f32 %v273, 0.0
    %v290 = vmin.f32 %v274, 0.0
    %v291 = vmin.f32 %v275, 0.0
    %v292 = vmin.f32 %v276, 0.0
    %v293 = vmin.f32 %v277, 0.0
    %v294 = vmin.f32 %v278, 0.0
    %v295 = vmin.f32 %v279, 0.0
    %v296 = vmin.f32 %v280, 0.0
    %v297 = vmin.f32 %v281, 0.0
    %v298 = vmin.f32 %v282, 0.0
    %v299 = vmin.f32 %v283, 0.0
    %v300 = vmin.f32 %v284, 0.0
    %v301 = vmin.f32 %v285, 0.0
    %v302 = vmin.f32 %v286, 0.0
    %v303 = vmin.f32 %v287, 0.0
    %v304 = vmin.f32 %v288, 0.0
    %v305 = vand.u32 2147483647, %v273
    %v306 = vand.u32 2147483647, %v274
    %v307 = vand.u32 2147483647, %v275
    %v308 = vand.u32 2147483647, %v276
    %v309 = vand.u32 2147483647, %v277
    %v310 = vand.u32 2147483647, %v278
    %v311 = vand.u32 2147483647, %v279
    %v312 = vand.u32 2147483647, %v280
    %v313 = vand.u32 2147483647, %v281
    %v314 = vand.u32 2147483647, %v282
    %v315 = vand.u32 2147483647, %v283
    %v316 = vand.u32 2147483647, %v284
    %v317 = vand.u32 2147483647, %v285
    %v318 = vand.u32 2147483647, %v286
    %v319 = vand.u32 2147483647, %v287
    %v320 = vand.u32 2147483647, %v288
    %v321 = vsub.f32 0.0, %v305
    %v322 = vsub.f32 0.0, %v306
    %v323 = vsub.f32 0.0, %v307
    %v324 = vsub.f32 0.0, %v308
    %v325 = vsub.f32 0.0, %v309
    %v326 = vsub.f32 0.0, %v310
    %v327 = vsub.f32 0.0, %v311
    %v328 = vsub.f32 0.0, %v312
    %v329 = vsub.f32 0.0, %v313
    %v330 = vsub.f32 0.0, %v314
    %v331 = vsub.f32 0.0, %v315
    %v332 = vsub.f32 0.0, %v316
    %v333 = vsub.f32 0.0, %v317
    %v334 = vsub.f32 0.0, %v318
    %v335 = vsub.f32 0.0, %v319
    %v336 = vsub.f32 0.0, %v320
    %v337 = vmul.f32 %v321, 1.442695
    %v338 = vpow.pop %v337
    %v339 = vmul.f32 %v322, 1.442695
    %v340 = vpow.pop %v339
    %v341 = vmul.f32 %v323, 1.442695
    %v342 = vpow.pop %v341
    %v343 = vmul.f32 %v324, 1.442695
    %v344 = vpow.pop %v343
    %v345 = vmul.f32 %v325, 1.442695
    %v346 = vpow.pop %v345
    %v347 = vmul.f32 %v326, 1.442695
    %v348 = vpow.pop %v347
    %v349 = vmul.f32 %v327, 1.442695
    %v350 = vpow.pop %v349
    %v351 = vmul.f32 %v328, 1.442695
    %v352 = vpow.pop %v351
    %v353 = vmul.f32 %v329, 1.442695
    %v354 = vpow.pop %v353
    %v355 = vmul.f32 %v330, 1.442695
    %v356 = vpow.pop %v355
    %v357 = vmul.f32 %v331, 1.442695
    %v358 = vpow.pop %v357
    %v359 = vmul.f32 %v332, 1.442695
    %v360 = vpow.pop %v359
    %v361 = vmul.f32 %v333, 1.442695
    %v362 = vpow.pop %v361
    %v363 = vmul.f32 %v334, 1.442695
    %v364 = vpow.pop %v363
    %v365 = vmul.f32 %v335, 1.442695
    %v366 = vpow.pop %v365
    %v367 = vmul.f32 %v336, 1.442695
    %v368 = vpow.pop %v367
    %v369 = vadd.f32 %v338, 1.0
    %v370 = vlog2.pop %v369
    %v371 = vmul.f32 %v370, 0.6931472
    %v372 = vmul.f32 -0.5, %v338
    %v373 = vadd.f32 %v372, 1.0
    %v374 = vmul.f32 %v373, %v338
    %v375 = vand.u32 2147483647, %v338
    %vm376 = vcmp.lt.f32.partialorder %v375, 0.0004427343
    %v377 = vsel %vm376, %v374, %v371
    %v378 = vadd.f32 %v340, 1.0
    %v379 = vlog2.pop %v378
    %v380 = vmul.f32 %v379, 0.6931472
    %v381 = vmul.f32 -0.5, %v340
    %v382 = vadd.f32 %v381, 1.0
    %v383 = vmul.f32 %v382, %v340
    %v384 = vand.u32 2147483647, %v340
    %vm385 = vcmp.lt.f32.partialorder %v384, 0.0004427343
    %v386 = vsel %vm385, %v383, %v380
    %v387 = vadd.f32 %v342, 1.0
    %v388 = vlog2.pop %v387
    %v389 = vmul.f32 %v388, 0.6931472
    %v390 = vmul.f32 -0.5, %v342
    %v391 = vadd.f32 %v390, 1.0
    %v392 = vmul.f32 %v391, %v342
    %v393 = vand.u32 2147483647, %v342
    %vm394 = vcmp.lt.f32.partialorder %v393, 0.0004427343
    %v395 = vsel %vm394, %v392, %v389
    %v396 = vadd.f32 %v344, 1.0
    %v397 = vlog2.pop %v396
    %v398 = vmul.f32 %v397, 0.6931472
    %v399 = vmul.f32 -0.5, %v344
    %v400 = vadd.f32 %v399, 1.0
    %v401 = vmul.f32 %v400, %v344
    %v402 = vand.u32 2147483647, %v344
    %vm403 = vcmp.lt.f32.partialorder %v402, 0.0004427343
    %v404 = vsel %vm403, %v401, %v398
    %v405 = vadd.f32 %v346, 1.0
    %v406 = vlog2.pop %v405
    %v407 = vmul.f32 %v406, 0.6931472
    %v408 = vmul.f32 -0.5, %v346
    %v409 = vadd.f32 %v408, 1.0
    %v410 = vmul.f32 %v409, %v346
    %v411 = vand.u32 2147483647, %v346
    %vm412 = vcmp.lt.f32.partialorder %v411, 0.0004427343
    %v413 = vsel %vm412, %v410, %v407
    %v414 = vadd.f32 %v348, 1.0
    %v415 = vlog2.pop %v414
    %v416 = vmul.f32 %v415, 0.6931472
    %v417 = vmul.f32 -0.5, %v348
    %v418 = vadd.f32 %v417, 1.0
    %v419 = vmul.f32 %v418, %v348
    %v420 = vand.u32 2147483647, %v348
    %vm421 = vcmp.lt.f32.partialorder %v420, 0.0004427343
    %v422 = vsel %vm421, %v419, %v416
    %v423 = vadd.f32 %v350, 1.0
    %v424 = vlog2.pop %v423
    %v425 = vmul.f32 %v424, 0.6931472
    %v426 = vmul.f32 -0.5, %v350
    %v427 = vadd.f32 %v426, 1.0
    %v428 = vmul.f32 %v427, %v350
    %v429 = vand.u32 2147483647, %v350
    %vm430 = vcmp.lt.f32.partialorder %v429, 0.0004427343
    %v431 = vsel %vm430, %v428, %v425
    %v432 = vadd.f32 %v352, 1.0
    %v433 = vlog2.pop %v432
    %v434 = vmul.f32 %v433, 0.6931472
    %v435 = vmul.f32 -0.5, %v352
    %v436 = vadd.f32 %v435, 1.0
    %v437 = vmul.f32 %v436, %v352
    %v438 = vand.u32 2147483647, %v352
    %vm439 = vcmp.lt.f32.partialorder %v438, 0.0004427343
    %v440 = vsel %vm439, %v437, %v434
    %v441 = vadd.f32 %v354, 1.0
    %v442 = vlog2.pop %v441
    %v443 = vmul.f32 %v442, 0.6931472
    %v444 = vmul.f32 -0.5, %v354
    %v445 = vadd.f32 %v444, 1.0
    %v446 = vmul.f32 %v445, %v354
    %v447 = vand.u32 2147483647, %v354
    %vm448 = vcmp.lt.f32.partialorder %v447, 0.0004427343
    %v449 = vsel %vm448, %v446, %v443
    %v450 = vadd.f32 %v356, 1.0
    %v451 = vlog2.pop %v450
    %v452 = vmul.f32 %v451, 0.6931472
    %v453 = vmul.f32 -0.5, %v356
    %v454 = vadd.f32 %v453, 1.0
    %v455 = vmul.f32 %v454, %v356
    %v456 = vand.u32 2147483647, %v356
    %vm457 = vcmp.lt.f32.partialorder %v456, 0.0004427343
    %v458 = vsel %vm457, %v455, %v452
    %v459 = vadd.f32 %v358, 1.0
    %v460 = vlog2.pop %v459
    %v461 = vmul.f32 %v460, 0.6931472
    %v462 = vmul.f32 -0.5, %v358
    %v463 = vadd.f32 %v462, 1.0
    %v464 = vmul.f32 %v463, %v358
    %v465 = vand.u32 2147483647, %v358
    %vm466 = vcmp.lt.f32.partialorder %v465, 0.0004427343
    %v467 = vsel %vm466, %v464, %v461
    %v468 = vadd.f32 %v360, 1.0
    %v469 = vlog2.pop %v468
    %v470 = vmul.f32 %v469, 0.6931472
    %v471 = vmul.f32 -0.5, %v360
    %v472 = vadd.f32 %v471, 1.0
    %v473 = vmul.f32 %v472, %v360
    %v474 = vand.u32 2147483647, %v360
    %vm475 = vcmp.lt.f32.partialorder %v474, 0.0004427343
    %v476 = vsel %vm475, %v473, %v470
    %v477 = vadd.f32 %v362, 1.0
    %v478 = vlog2.pop %v477
    %v479 = vmul.f32 %v478, 0.6931472
    %v480 = vmul.f32 -0.5, %v362
    %v481 = vadd.f32 %v480, 1.0
    %v482 = vmul.f32 %v481, %v362
    %v483 = vand.u32 2147483647, %v362
    %vm484 = vcmp.lt.f32.partialorder %v483, 0.0004427343
    %v485 = vsel %vm484, %v482, %v479
    %v486 = vadd.f32 %v364, 1.0
    %v487 = vlog2.pop %v486
    %v488 = vmul.f32 %v487, 0.6931472
    %v489 = vmul.f32 -0.5, %v364
    %v490 = vadd.f32 %v489, 1.0
    %v491 = vmul.f32 %v490, %v364
    %v492 = vand.u32 2147483647, %v364
    %vm493 = vcmp.lt.f32.partialorder %v492, 0.0004427343
    %v494 = vsel %vm493, %v491, %v488
    %v495 = vadd.f32 %v366, 1.0
    %v496 = vlog2.pop %v495
    %v497 = vmul.f32 %v496, 0.6931472
    %v498 = vmul.f32 -0.5, %v366
    %v499 = vadd.f32 %v498, 1.0
    %v500 = vmul.f32 %v499, %v366
    %v501 = vand.u32 2147483647, %v366
    %vm502 = vcmp.lt.f32.partialorder %v501, 0.0004427343
    %v503 = vsel %vm502, %v500, %v497
    %v504 = vadd.f32 %v368, 1.0
    %v505 = vlog2.pop %v504
    %v506 = vmul.f32 %v505, 0.6931472
    %v507 = vmul.f32 -0.5, %v368
    %v508 = vadd.f32 %v507, 1.0
    %v509 = vmul.f32 %v508, %v368
    %v510 = vand.u32 2147483647, %v368
    %vm511 = vcmp.lt.f32.partialorder %v510, 0.0004427343
    %v512 = vsel %vm511, %v509, %v506
    %v513 = vsub.f32 %v289, %v377
    %v514 = vsub.f32 %v290, %v386
    %v515 = vsub.f32 %v291, %v395
    %v516 = vsub.f32 %v292, %v404
    %v517 = vsub.f32 %v293, %v413
    %v518 = vsub.f32 %v294, %v422
    %v519 = vsub.f32 %v295, %v431
    %v520 = vsub.f32 %v296, %v440
    %v521 = vsub.f32 %v297, %v449
    %v522 = vsub.f32 %v298, %v458
    %v523 = vsub.f32 %v299, %v467
    %v524 = vsub.f32 %v300, %v476
    %v525 = vsub.f32 %v301, %v485
    %v526 = vsub.f32 %v302, %v494
    %v527 = vsub.f32 %v303, %v503
    %v528 = vsub.f32 %v304, %v512
    %v529 = vsub.f32 0.0, %v513
    %v530 = vsub.f32 0.0, %v514
    %v531 = vsub.f32 0.0, %v515
    %v532 = vsub.f32 0.0, %v516
    %v533 = vsub.f32 0.0, %v517
    %v534 = vsub.f32 0.0, %v518
    %v535 = vsub.f32 0.0, %v519
    %v536 = vsub.f32 0.0, %v520
    %v537 = vsub.f32 0.0, %v521
    %v538 = vsub.f32 0.0, %v522
    %v539 = vsub.f32 0.0, %v523
    %v540 = vsub.f32 0.0, %v524
    %v541 = vsub.f32 0.0, %v525
    %v542 = vsub.f32 0.0, %v526
    %v543 = vsub.f32 0.0, %v527
    %v544 = vsub.f32 0.0, %v528
    %561 = vset.pattern.permute.xlu0 0
    %562 = vperm.xlu0 %561, %v529
    %v563 = vpop.permute.xlu0 %562
    %564 = vset.pattern.permute.xlu0 0
    %565 = vperm.xlu0 %564, %v530
    %v566 = vpop.permute.xlu0 %565
    %567 = vset.pattern.permute.xlu0 0
    %568 = vperm.xlu0 %567, %v531
    %v569 = vpop.permute.xlu0 %568
    %570 = vset.pattern.permute.xlu0 0
    %571 = vperm.xlu0 %570, %v532
    %v572 = vpop.permute.xlu0 %571
    %573 = vset.pattern.permute.xlu0 0
    %574 = vperm.xlu0 %573, %v533
    %v575 = vpop.permute.xlu0 %574
    %576 = vset.pattern.permute.xlu0 0
    %577 = vperm.xlu0 %576, %v534
    %v578 = vpop.permute.xlu0 %577
    %579 = vset.pattern.permute.xlu0 0
    %580 = vperm.xlu0 %579, %v535
    %v581 = vpop.permute.xlu0 %580
    %582 = vset.pattern.permute.xlu0 0
    %583 = vperm.xlu0 %582, %v536
    %v584 = vpop.permute.xlu0 %583
    %585 = vset.pattern.permute.xlu0 0
    %586 = vperm.xlu0 %585, %v537
    %v587 = vpop.permute.xlu0 %586
    %588 = vset.pattern.permute.xlu0 0
    %589 = vperm.xlu0 %588, %v538
    %v590 = vpop.permute.xlu0 %589
    %591 = vset.pattern.permute.xlu0 0
    %592 = vperm.xlu0 %591, %v539
    %v593 = vpop.permute.xlu0 %592
    %594 = vset.pattern.permute.xlu0 0
    %595 = vperm.xlu0 %594, %v540
    %v596 = vpop.permute.xlu0 %595
    %597 = vset.pattern.permute.xlu0 0
    %598 = vperm.xlu0 %597, %v541
    %v599 = vpop.permute.xlu0 %598
    %600 = vset.pattern.permute.xlu0 0
    %601 = vperm.xlu0 %600, %v542
    %v602 = vpop.permute.xlu0 %601
    %603 = vset.pattern.permute.xlu0 0
    %604 = vperm.xlu0 %603, %v543
    %v605 = vpop.permute.xlu0 %604
    %606 = vset.pattern.permute.xlu0 0
    %607 = vperm.xlu0 %606, %v544
    %v608 = vpop.permute.xlu0 %607
    %v609 = vlaneseq
    %v610 = vand.u32 %v609, 127
    %v611 = vperm.slane %v563, %v610
    %v612 = vadd.s32 %v610, 4294967288
    %v613 = vperm.slane %v566, %v612
    %vm614 = vcmask 130112
    %v615 = vsel %vm614, %v613, %v611
    %v616 = vadd.s32 %v610, 4294967280
    %v617 = vperm.slane %v569, %v616
    %vm618 = vcmask 195712
    %v619 = vsel %vm618, %v617, %v615
    %v620 = vadd.s32 %v610, 4294967272
    %v621 = vperm.slane %v572, %v620
    %vm622 = vcmask 261312
    %v623 = vsel %vm622, %v621, %v619
    %v624 = vadd.s32 %v610, 4294967264
    %v625 = vperm.slane %v575, %v624
    %vm626 = vcmask 326912
    %v627 = vsel %vm626, %v625, %v623
    %v628 = vadd.s32 %v610, 4294967256
    %v629 = vperm.slane %v578, %v628
    %vm630 = vcmask 392512
    %v631 = vsel %vm630, %v629, %v627
    %v632 = vadd.s32 %v610, 4294967248
    %v633 = vperm.slane %v581, %v632
    %vm634 = vcmask 458112
    %v635 = vsel %vm634, %v633, %v631
    %v636 = vadd.s32 %v610, 4294967240
    %v637 = vperm.slane %v584, %v636
    %vm638 = vcmask 523712
    %v639 = vsel %vm638, %v637, %v635
    %v640 = vadd.s32 %v610, 4294967232
    %v641 = vperm.slane %v587, %v640
    %vm642 = vcmask 589312
    %v643 = vsel %vm642, %v641, %v639
    %v644 = vadd.s32 %v610, 4294967224
    %v645 = vperm.slane %v590, %v644
    %vm646 = vcmask 654912
    %v647 = vsel %vm646, %v645, %v643
    %v648 = vadd.s32 %v610, 4294967216
    %v649 = vperm.slane %v593, %v648
    %vm650 = vcmask 720512
    %v651 = vsel %vm650, %v649, %v647
    %v652 = vadd.s32 %v610, 4294967208
    %v653 = vperm.slane %v596, %v652
    %vm654 = vcmask 786112
    %v655 = vsel %vm654, %v653, %v651
    %v656 = vadd.s32 %v610, 4294967200
    %v657 = vperm.slane %v599, %v656
    %vm658 = vcmask 851712
    %v659 = vsel %vm658, %v657, %v655
    %v660 = vadd.s32 %v610, 4294967192
    %v661 = vperm.slane %v602, %v660
    %vm662 = vcmask 917312
    %v663 = vsel %vm662, %v661, %v659
    %v664 = vadd.s32 %v610, 4294967184
    %v665 = vperm.slane %v605, %v664
    %vm666 = vcmask 982912
    %v667 = vsel %vm666, %v665, %v663
    %v668 = vadd.s32 %v610, 4294967176
    %v669 = vperm.slane %v608, %v668
    %vm670 = vcmask 1048512
    %v671 = vsel %vm670, %v669, %v667
    %673 = vst [vmem:[#allocation2] sm:$0x1] %v671
  $region29: #{kge_neg_sampling_loss.1} parent=0 // pred_fallthru
    _
  %v674 = vpack.c.bf16 %v59, %v58
  %v675 = vpack.c.bf16 %v61, %v60
  %v676 = vpack.c.bf16 %v63, %v62
  %v677 = vpack.c.bf16 %v65, %v64
  %v678 = vpack.c.bf16 %v67, %v66
  %v679 = vpack.c.bf16 %v69, %v68
  %v680 = vpack.c.bf16 %v71, %v70
  %v681 = vpack.c.bf16 %v73, %v72
  %v682 = vld [vmem:[%s4] sm:$0xf]
  %v683 = vld [vmem:[%s4 + $0x4] sm:$0xf]
  %v684 = vld [vmem:[%s4 + $0x8] sm:$0xf]
  %v685 = vld [vmem:[%s4 + $0xc] sm:$0xf]
  %v686 = vld [vmem:[%s4 + $0x10] sm:$0xf]
  %v687 = vld [vmem:[%s4 + $0x14] sm:$0xf]
  %v688 = vld [vmem:[%s4 + $0x18] sm:$0xf]
  %v689 = vld [vmem:[%s4 + $0x1c] sm:$0xf]
  %v690 = vld [vmem:[%s4 + $0x20] sm:$0xf]
  %v691 = vld [vmem:[%s4 + $0x24] sm:$0xf]
  %v692 = vld [vmem:[%s4 + $0x28] sm:$0xf]
  %v693 = vld [vmem:[%s4 + $0x2c] sm:$0xf]
  %v694 = vld [vmem:[%s4 + $0x30] sm:$0xf]
  %v695 = vld [vmem:[%s4 + $0x34] sm:$0xf]
  %v696 = vld [vmem:[%s4 + $0x38] sm:$0xf]
  %v697 = vld [vmem:[%s4 + $0x3c] sm:$0xf]
  %v698 = vld [vmem:[%s5] sm:$0x1]
  %v700 = vperm.slane %v698, 0
  %v718 = vunpack.c.l.b16 %v682
  %v719 = vunpack.c.l.b16 %v683
  %v720 = vunpack.c.l.b16 %v684
  %v721 = vunpack.c.l.b16 %v685
  %v722 = vunpack.c.l.b16 %v686
  %v723 = vunpack.c.l.b16 %v687
  %v724 = vunpack.c.l.b16 %v688
  %v725 = vunpack.c.l.b16 %v689
  %v726 = vunpack.c.l.b16 %v690
  %v727 = vunpack.c.l.b16 %v691
  %v728 = vunpack.c.l.b16 %v692
  %v729 = vunpack.c.l.b16 %v693
  %v730 = vunpack.c.l.b16 %v694
  %v731 = vunpack.c.l.b16 %v695
  %v732 = vunpack.c.l.b16 %v696
  %v733 = vunpack.c.l.b16 %v697
  %v734 = vpack.c.b16 %v719, %v718
  %v735 = vpack.c.b16 %v721, %v720
  %v736 = vpack.c.b16 %v723, %v722
  %v737 = vpack.c.b16 %v725, %v724
  %v738 = vpack.c.b16 %v727, %v726
  %v739 = vpack.c.b16 %v729, %v728
  %v740 = vpack.c.b16 %v731, %v730
  %v741 = vpack.c.b16 %v733, %v732
  %750 = vmatpush.bf16.xpose.msra.mxu0 %v741
  %751 = vmatpush.bf16.xpose.msra.mxu0 %v740
  %752 = vmatpush.bf16.xpose.msra.mxu0 %v739
  %753 = vmatpush.bf16.xpose.msra.mxu0 %v738
  %754 = vmatpush.bf16.xpose.msra.mxu0 %v737
  %755 = vmatpush.bf16.xpose.msra.mxu0 %v736
  %756 = vmatpush.bf16.xpose.msra.mxu0 %v735
  %757 = vmatpush.bf16.xpose.msra.mxu0 %v734
  %758 = vmatmul.bf16.gmra.mxu0 %v674
  %v759 = vpop.f32.mrf.mxu0
  %v760 = vadd.f32 %v700, %v759
  %v761 = vpop.f32.mrf.mxu0
  %v762 = vadd.f32 %v700, %v761
  %763 = vmatmul.bf16.gmra.mxu0 %v675
  %v764 = vpop.f32.mrf.mxu0
  %v765 = vadd.f32 %v700, %v764
  %v766 = vpop.f32.mrf.mxu0
  %v767 = vadd.f32 %v700, %v766
  %768 = vmatmul.bf16.gmra.mxu0 %v676
  %v769 = vpop.f32.mrf.mxu0
  %v770 = vadd.f32 %v700, %v769
  %v771 = vpop.f32.mrf.mxu0
  %v772 = vadd.f32 %v700, %v771
  %773 = vmatmul.bf16.gmra.mxu0 %v677
  %v774 = vpop.f32.mrf.mxu0
  %v775 = vadd.f32 %v700, %v774
  %v776 = vpop.f32.mrf.mxu0
  %v777 = vadd.f32 %v700, %v776
  %778 = vmatmul.bf16.gmra.mxu0 %v678
  %v779 = vpop.f32.mrf.mxu0
  %v780 = vadd.f32 %v700, %v779
  %v781 = vpop.f32.mrf.mxu0
  %v782 = vadd.f32 %v700, %v781
  %783 = vmatmul.bf16.gmra.mxu0 %v679
  %v784 = vpop.f32.mrf.mxu0
  %v785 = vadd.f32 %v700, %v784
  %v786 = vpop.f32.mrf.mxu0
  %v787 = vadd.f32 %v700, %v786
  %788 = vmatmul.bf16.gmra.mxu0 %v680
  %v789 = vpop.f32.mrf.mxu0
  %v790 = vadd.f32 %v700, %v789
  %v791 = vpop.f32.mrf.mxu0
  %v792 = vadd.f32 %v700, %v791
  %793 = vmatmul.bf16.gmra.mxu0 %v681
  %v794 = vpop.f32.mrf.mxu0
  %v795 = vadd.f32 %v700, %v794
  %v796 = vpop.f32.mrf.mxu0
  %v797 = vadd.f32 %v700, %v796
  %798 = vdwg.mxu0
  %v799 = vsub.f32 0.0, %v760
  %v800 = vsub.f32 0.0, %v762
  %v801 = vsub.f32 0.0, %v765
  %v802 = vsub.f32 0.0, %v767
  %v803 = vsub.f32 0.0, %v770
  %v804 = vsub.f32 0.0, %v772
  %v805 = vsub.f32 0.0, %v775
  %v806 = vsub.f32 0.0, %v777
  %v807 = vsub.f32 0.0, %v780
  %v808 = vsub.f32 0.0, %v782
  %v809 = vsub.f32 0.0, %v785
  %v810 = vsub.f32 0.0, %v787
  %v811 = vsub.f32 0.0, %v790
  %v812 = vsub.f32 0.0, %v792
  %v813 = vsub.f32 0.0, %v795
  %v814 = vsub.f32 0.0, %v797
  %v815 = vmin.f32 %v799, 0.0
  %v816 = vmin.f32 %v800, 0.0
  %v817 = vmin.f32 %v801, 0.0
  %v818 = vmin.f32 %v802, 0.0
  %v819 = vmin.f32 %v803, 0.0
  %v820 = vmin.f32 %v804, 0.0
  %v821 = vmin.f32 %v805, 0.0
  %v822 = vmin.f32 %v806, 0.0
  %v823 = vmin.f32 %v807, 0.0
  %v824 = vmin.f32 %v808, 0.0
  %v825 = vmin.f32 %v809, 0.0
  %v826 = vmin.f32 %v810, 0.0
  %v827 = vmin.f32 %v811, 0.0
  %v828 = vmin.f32 %v812, 0.0
  %v829 = vmin.f32 %v813, 0.0
  %v830 = vmin.f32 %v814, 0.0
  %v831 = vand.u32 2147483647, %v799
  %v832 = vand.u32 2147483647, %v800
  %v833 = vand.u32 2147483647, %v801
  %v834 = vand.u32 2147483647, %v802
  %v835 = vand.u32 2147483647, %v803
  %v836 = vand.u32 2147483647, %v804
  %v837 = vand.u32 2147483647, %v805
  %v838 = vand.u32 2147483647, %v806
  %v839 = vand.u32 2147483647, %v807
  %v840 = vand.u32 2147483647, %v808
  %v841 = vand.u32 2147483647, %v809
  %v842 = vand.u32 2147483647, %v810
  %v843 = vand.u32 2147483647, %v811
  %v844 = vand.u32 2147483647, %v812
  %v845 = vand.u32 2147483647, %v813
  %v846 = vand.u32 2147483647, %v814
  %v847 = vsub.f32 0.0, %v831
  %v848 = vsub.f32 0.0, %v832
  %v849 = vsub.f32 0.0, %v833
  %v850 = vsub.f32 0.0, %v834
  %v851 = vsub.f32 0.0, %v835
  %v852 = vsub.f32 0.0, %v836
  %v853 = vsub.f32 0.0, %v837
  %v854 = vsub.f32 0.0, %v838
  %v855 = vsub.f32 0.0, %v839
  %v856 = vsub.f32 0.0, %v840
  %v857 = vsub.f32 0.0, %v841
  %v858 = vsub.f32 0.0, %v842
  %v859 = vsub.f32 0.0, %v843
  %v860 = vsub.f32 0.0, %v844
  %v861 = vsub.f32 0.0, %v845
  %v862 = vsub.f32 0.0, %v846
  %v863 = vmul.f32 %v847, 1.442695
  %v864 = vpow.pop %v863
  %v865 = vmul.f32 %v848, 1.442695
  %v866 = vpow.pop %v865
  %v867 = vmul.f32 %v849, 1.442695
  %v868 = vpow.pop %v867
  %v869 = vmul.f32 %v850, 1.442695
  %v870 = vpow.pop %v869
  %v871 = vmul.f32 %v851, 1.442695
  %v872 = vpow.pop %v871
  %v873 = vmul.f32 %v852, 1.442695
  %v874 = vpow.pop %v873
  %v875 = vmul.f32 %v853, 1.442695
  %v876 = vpow.pop %v875
  %v877 = vmul.f32 %v854, 1.442695
  %v878 = vpow.pop %v877
  %v879 = vmul.f32 %v855, 1.442695
  %v880 = vpow.pop %v879
  %v881 = vmul.f32 %v856, 1.442695
  %v882 = vpow.pop %v881
  %v883 = vmul.f32 %v857, 1.442695
  %v884 = vpow.pop %v883
  %v885 = vmul.f32 %v858, 1.442695
  %v886 = vpow.pop %v885
  %v887 = vmul.f32 %v859, 1.442695
  %v888 = vpow.pop %v887
  %v889 = vmul.f32 %v860, 1.442695
  %v890 = vpow.pop %v889
  %v891 = vmul.f32 %v861, 1.442695
  %v892 = vpow.pop %v891
  %v893 = vmul.f32 %v862, 1.442695
  %v894 = vpow.pop %v893
  %v895 = vadd.f32 %v864, 1.0
  %v896 = vlog2.pop %v895
  %v897 = vmul.f32 %v896, 0.6931472
  %v898 = vmul.f32 -0.5, %v864
  %v899 = vadd.f32 %v898, 1.0
  %v900 = vmul.f32 %v899, %v864
  %v901 = vand.u32 2147483647, %v864
  %vm902 = vcmp.lt.f32.partialorder %v901, 0.0004427343
  %v903 = vsel %vm902, %v900, %v897
  %v904 = vadd.f32 %v866, 1.0
  %v905 = vlog2.pop %v904
  %v906 = vmul.f32 %v905, 0.6931472
  %v907 = vmul.f32 -0.5, %v866
  %v908 = vadd.f32 %v907, 1.0
  %v909 = vmul.f32 %v908, %v866
  %v910 = vand.u32 2147483647, %v866
  %vm911 = vcmp.lt.f32.partialorder %v910, 0.0004427343
  %v912 = vsel %vm911, %v909, %v906
  %v913 = vadd.f32 %v868, 1.0
  %v914 = vlog2.pop %v913
  %v915 = vmul.f32 %v914, 0.6931472
  %v916 = vmul.f32 -0.5, %v868
  %v917 = vadd.f32 %v916, 1.0
  %v918 = vmul.f32 %v917, %v868
  %v919 = vand.u32 2147483647, %v868
  %vm920 = vcmp.lt.f32.partialorder %v919, 0.0004427343
  %v921 = vsel %vm920, %v918, %v915
  %v922 = vadd.f32 %v870, 1.0
  %v923 = vlog2.pop %v922
  %v924 = vmul.f32 %v923, 0.6931472
  %v925 = vmul.f32 -0.5, %v870
  %v926 = vadd.f32 %v925, 1.0
  %v927 = vmul.f32 %v926, %v870
  %v928 = vand.u32 2147483647, %v870
  %vm929 = vcmp.lt.f32.partialorder %v928, 0.0004427343
  %v930 = vsel %vm929, %v927, %v924
  %v931 = vadd.f32 %v872, 1.0
  %v932 = vlog2.pop %v931
  %v933 = vmul.f32 %v932, 0.6931472
  %v934 = vmul.f32 -0.5, %v872
  %v935 = vadd.f32 %v934, 1.0
  %v936 = vmul.f32 %v935, %v872
  %v937 = vand.u32 2147483647, %v872
  %vm938 = vcmp.lt.f32.partialorder %v937, 0.0004427343
  %v939 = vsel %vm938, %v936, %v933
  %v940 = vadd.f32 %v874, 1.0
  %v941 = vlog2.pop %v940
  %v942 = vmul.f32 %v941, 0.6931472
  %v943 = vmul.f32 -0.5, %v874
  %v944 = vadd.f32 %v943, 1.0
  %v945 = vmul.f32 %v944, %v874
  %v946 = vand.u32 2147483647, %v874
  %vm947 = vcmp.lt.f32.partialorder %v946, 0.0004427343
  %v948 = vsel %vm947, %v945, %v942
  %v949 = vadd.f32 %v876, 1.0
  %v950 = vlog2.pop %v949
  %v951 = vmul.f32 %v950, 0.6931472
  %v952 = vmul.f32 -0.5, %v876
  %v953 = vadd.f32 %v952, 1.0
  %v954 = vmul.f32 %v953, %v876
  %v955 = vand.u32 2147483647, %v876
  %vm956 = vcmp.lt.f32.partialorder %v955, 0.0004427343
  %v957 = vsel %vm956, %v954, %v951
  %v958 = vadd.f32 %v878, 1.0
  %v959 = vlog2.pop %v958
  %v960 = vmul.f32 %v959, 0.6931472
  %v961 = vmul.f32 -0.5, %v878
  %v962 = vadd.f32 %v961, 1.0
  %v963 = vmul.f32 %v962, %v878
  %v964 = vand.u32 2147483647, %v878
  %vm965 = vcmp.lt.f32.partialorder %v964, 0.0004427343
  %v966 = vsel %vm965, %v963, %v960
  %v967 = vadd.f32 %v880, 1.0
  %v968 = vlog2.pop %v967
  %v969 = vmul.f32 %v968, 0.6931472
  %v970 = vmul.f32 -0.5, %v880
  %v971 = vadd.f32 %v970, 1.0
  %v972 = vmul.f32 %v971, %v880
  %v973 = vand.u32 2147483647, %v880
  %vm974 = vcmp.lt.f32.partialorder %v973, 0.0004427343
  %v975 = vsel %vm974, %v972, %v969
  %v976 = vadd.f32 %v882, 1.0
  %v977 = vlog2.pop %v976
  %v978 = vmul.f32 %v977, 0.6931472
  %v979 = vmul.f32 -0.5, %v882
  %v980 = vadd.f32 %v979, 1.0
  %v981 = vmul.f32 %v980, %v882
  %v982 = vand.u32 2147483647, %v882
  %vm983 = vcmp.lt.f32.partialorder %v982, 0.0004427343
  %v984 = vsel %vm983, %v981, %v978
  %v985 = vadd.f32 %v884, 1.0
  %v986 = vlog2.pop %v985
  %v987 = vmul.f32 %v986, 0.6931472
  %v988 = vmul.f32 -0.5, %v884
  %v989 = vadd.f32 %v988, 1.0
  %v990 = vmul.f32 %v989, %v884
  %v991 = vand.u32 2147483647, %v884
  %vm992 = vcmp.lt.f32.partialorder %v991, 0.0004427343
  %v993 = vsel %vm992, %v990, %v987
  %v994 = vadd.f32 %v886, 1.0
  %v995 = vlog2.pop %v994
  %v996 = vmul.f32 %v995, 0.6931472
  %v997 = vmul.f32 -0.5, %v886
  %v998 = vadd.f32 %v997, 1.0
  %v999 = vmul.f32 %v998, %v886
  %v1000 = vand.u32 2147483647, %v886
  %vm1001 = vcmp.lt.f32.partialorder %v1000, 0.0004427343
  %v1002 = vsel %vm1001, %v999, %v996
  %v1003 = vadd.f32 %v888, 1.0
  %v1004 = vlog2.pop %v1003
  %v1005 = vmul.f32 %v1004, 0.6931472
  %v1006 = vmul.f32 -0.5, %v888
  %v1007 = vadd.f32 %v1006, 1.0
  %v1008 = vmul.f32 %v1007, %v888
  %v1009 = vand.u32 2147483647, %v888
  %vm1010 = vcmp.lt.f32.partialorder %v1009, 0.0004427343
  %v1011 = vsel %vm1010, %v1008, %v1005
  %v1012 = vadd.f32 %v890, 1.0
  %v1013 = vlog2.pop %v1012
  %v1014 = vmul.f32 %v1013, 0.6931472
  %v1015 = vmul.f32 -0.5, %v890
  %v1016 = vadd.f32 %v1015, 1.0
  %v1017 = vmul.f32 %v1016, %v890
  %v1018 = vand.u32 2147483647, %v890
  %vm1019 = vcmp.lt.f32.partialorder %v1018, 0.0004427343
  %v1020 = vsel %vm1019, %v1017, %v1014
  %v1021 = vadd.f32 %v892, 1.0
  %v1022 = vlog2.pop %v1021
  %v1023 = vmul.f32 %v1022, 0.6931472
  %v1024 = vmul.f32 -0.5, %v892
  %v1025 = vadd.f32 %v1024, 1.0
  %v1026 = vmul.f32 %v1025, %v892
  %v1027 = vand.u32 2147483647, %v892
  %vm1028 = vcmp.lt.f32.partialorder %v1027, 0.0004427343
  %v1029 = vsel %vm1028, %v1026, %v1023
  %v1030 = vadd.f32 %v894, 1.0
  %v1031 = vlog2.pop %v1030
  %v1032 = vmul.f32 %v1031, 0.6931472
  %v1033 = vmul.f32 -0.5, %v894
  %v1034 = vadd.f32 %v1033, 1.0
  %v1035 = vmul.f32 %v1034, %v894
  %v1036 = vand.u32 2147483647, %v894
  %vm1037 = vcmp.lt.f32.partialorder %v1036, 0.0004427343
  %v1038 = vsel %vm1037, %v1035, %v1032
  %v1039 = vsub.f32 %v815, %v903
  %v1040 = vsub.f32 %v816, %v912
  %v1041 = vsub.f32 %v817, %v921
  %v1042 = vsub.f32 %v818, %v930
  %v1043 = vsub.f32 %v819, %v939
  %v1044 = vsub.f32 %v820, %v948
  %v1045 = vsub.f32 %v821, %v957
  %v1046 = vsub.f32 %v822, %v966
  %v1047 = vsub.f32 %v823, %v975
  %v1048 = vsub.f32 %v824, %v984
  %v1049 = vsub.f32 %v825, %v993
  %v1050 = vsub.f32 %v826, %v1002
  %v1051 = vsub.f32 %v827, %v1011
  %v1052 = vsub.f32 %v828, %v1020
  %v1053 = vsub.f32 %v829, %v1029
  %v1054 = vsub.f32 %v830, %v1038
  %v1055 = vsub.f32 0.0, %v1039
  %v1056 = vsub.f32 0.0, %v1040
  %v1057 = vsub.f32 0.0, %v1041
  %v1058 = vsub.f32 0.0, %v1042
  %v1059 = vsub.f32 0.0, %v1043
  %v1060 = vsub.f32 0.0, %v1044
  %v1061 = vsub.f32 0.0, %v1045
  %v1062 = vsub.f32 0.0, %v1046
  %v1063 = vsub.f32 0.0, %v1047
  %v1064 = vsub.f32 0.0, %v1048
  %v1065 = vsub.f32 0.0, %v1049
  %v1066 = vsub.f32 0.0, %v1050
  %v1067 = vsub.f32 0.0, %v1051
  %v1068 = vsub.f32 0.0, %v1052
  %v1069 = vsub.f32 0.0, %v1053
  %v1070 = vsub.f32 0.0, %v1054
  %1071 = vadd.xlane.f32.xlu0 %v1055
  %v1072 = vpop.xlane.xlu0 %1071
  %1073 = vadd.xlane.f32.xlu0 %v1056
  %v1074 = vpop.xlane.xlu0 %1073
  %1075 = vadd.xlane.f32.xlu0 %v1057
  %v1076 = vpop.xlane.xlu0 %1075
  %1077 = vadd.xlane.f32.xlu0 %v1058
  %v1078 = vpop.xlane.xlu0 %1077
  %1079 = vadd.xlane.f32.xlu0 %v1059
  %v1080 = vpop.xlane.xlu0 %1079
  %1081 = vadd.xlane.f32.xlu0 %v1060
  %v1082 = vpop.xlane.xlu0 %1081
  %1083 = vadd.xlane.f32.xlu0 %v1061
  %v1084 = vpop.xlane.xlu0 %1083
  %1085 = vadd.xlane.f32.xlu0 %v1062
  %v1086 = vpop.xlane.xlu0 %1085
  %1087 = vadd.xlane.f32.xlu0 %v1063
  %v1088 = vpop.xlane.xlu0 %1087
  %1089 = vadd.xlane.f32.xlu0 %v1064
  %v1090 = vpop.xlane.xlu0 %1089
  %1091 = vadd.xlane.f32.xlu0 %v1065
  %v1092 = vpop.xlane.xlu0 %1091
  %1093 = vadd.xlane.f32.xlu0 %v1066
  %v1094 = vpop.xlane.xlu0 %1093
  %1095 = vadd.xlane.f32.xlu0 %v1067
  %v1096 = vpop.xlane.xlu0 %1095
  %1097 = vadd.xlane.f32.xlu0 %v1068
  %v1098 = vpop.xlane.xlu0 %1097
  %1099 = vadd.xlane.f32.xlu0 %v1069
  %v1100 = vpop.xlane.xlu0 %1099
  %1101 = vadd.xlane.f32.xlu0 %v1070
  %v1102 = vpop.xlane.xlu0 %1101
  %v1103 = vld [vmem:[#allocation2] sm:$0x1]
  %v1120 = vperm.slane %v1072, 0
  %v1121 = vperm.slane %v1072, 1
  %v1122 = vperm.slane %v1072, 2
  %v1123 = vperm.slane %v1072, 3
  %v1124 = vperm.slane %v1072, 4
  %v1125 = vperm.slane %v1072, 5
  %v1126 = vperm.slane %v1072, 6
  %v1127 = vperm.slane %v1072, 7
  %v1128 = vperm.slane %v1074, 0
  %v1129 = vperm.slane %v1074, 1
  %v1130 = vperm.slane %v1074, 2
  %v1131 = vperm.slane %v1074, 3
  %v1132 = vperm.slane %v1074, 4
  %v1133 = vperm.slane %v1074, 5
  %v1134 = vperm.slane %v1074, 6
  %v1135 = vperm.slane %v1074, 7
  %v1136 = vperm.slane %v1076, 0
  %v1137 = vperm.slane %v1076, 1
  %v1138 = vperm.slane %v1076, 2
  %v1139 = vperm.slane %v1076, 3
  %v1140 = vperm.slane %v1076, 4
  %v1141 = vperm.slane %v1076, 5
  %v1142 = vperm.slane %v1076, 6
  %v1143 = vperm.slane %v1076, 7
  %v1144 = vperm.slane %v1078, 0
  %v1145 = vperm.slane %v1078, 1
  %v1146 = vperm.slane %v1078, 2
  %v1147 = vperm.slane %v1078, 3
  %v1148 = vperm.slane %v1078, 4
  %v1149 = vperm.slane %v1078, 5
  %v1150 = vperm.slane %v1078, 6
  %v1151 = vperm.slane %v1078, 7
  %v1152 = vperm.slane %v1080, 0
  %v1153 = vperm.slane %v1080, 1
  %v1154 = vperm.slane %v1080, 2
  %v1155 = vperm.slane %v1080, 3
  %v1156 = vperm.slane %v1080, 4
  %v1157 = vperm.slane %v1080, 5
  %v1158 = vperm.slane %v1080, 6
  %v1159 = vperm.slane %v1080, 7
  %v1160 = vperm.slane %v1082, 0
  %v1161 = vperm.slane %v1082, 1
  %v1162 = vperm.slane %v1082, 2
  %v1163 = vperm.slane %v1082, 3
  %v1164 = vperm.slane %v1082, 4
  %v1165 = vperm.slane %v1082, 5
  %v1166 = vperm.slane %v1082, 6
  %v1167 = vperm.slane %v1082, 7
  %v1168 = vperm.slane %v1084, 0
  %v1169 = vperm.slane %v1084, 1
  %v1170 = vperm.slane %v1084, 2
  %v1171 = vperm.slane %v1084, 3
  %v1172 = vperm.slane %v1084, 4
  %v1173 = vperm.slane %v1084, 5
  %v1174 = vperm.slane %v1084, 6
  %v1175 = vperm.slane %v1084, 7
  %v1176 = vperm.slane %v1086, 0
  %v1177 = vperm.slane %v1086, 1
  %v1178 = vperm.slane %v1086, 2
  %v1179 = vperm.slane %v1086, 3
  %v1180 = vperm.slane %v1086, 4
  %v1181 = vperm.slane %v1086, 5
  %v1182 = vperm.slane %v1086, 6
  %v1183 = vperm.slane %v1086, 7
  %v1184 = vperm.slane %v1088, 0
  %v1185 = vperm.slane %v1088, 1
  %v1186 = vperm.slane %v1088, 2
  %v1187 = vperm.slane %v1088, 3
  %v1188 = vperm.slane %v1088, 4
  %v1189 = vperm.slane %v1088, 5
  %v1190 = vperm.slane %v1088, 6
  %v1191 = vperm.slane %v1088, 7
  %v1192 = vperm.slane %v1090, 0
  %v1193 = vperm.slane %v1090, 1
  %v1194 = vperm.slane %v1090, 2
  %v1195 = vperm.slane %v1090, 3
  %v1196 = vperm.slane %v1090, 4
  %v1197 = vperm.slane %v1090, 5
  %v1198 = vperm.slane %v1090, 6
  %v1199 = vperm.slane %v1090, 7
  %v1200 = vperm.slane %v1092, 0
  %v1201 = vperm.slane %v1092, 1
  %v1202 = vperm.slane %v1092, 2
  %v1203 = vperm.slane %v1092, 3
  %v1204 = vperm.slane %v1092, 4
  %v1205 = vperm.slane %v1092, 5
  %v1206 = vperm.slane %v1092, 6
  %v1207 = vperm.slane %v1092, 7
  %v1208 = vperm.slane %v1094, 0
  %v1209 = vperm.slane %v1094, 1
  %v1210 = vperm.slane %v1094, 2
  %v1211 = vperm.slane %v1094, 3
  %v1212 = vperm.slane %v1094, 4
  %v1213 = vperm.slane %v1094, 5
  %v1214 = vperm.slane %v1094, 6
  %v1215 = vperm.slane %v1094, 7
  %v1216 = vperm.slane %v1096, 0
  %v1217 = vperm.slane %v1096, 1
  %v1218 = vperm.slane %v1096, 2
  %v1219 = vperm.slane %v1096, 3
  %v1220 = vperm.slane %v1096, 4
  %v1221 = vperm.slane %v1096, 5
  %v1222 = vperm.slane %v1096, 6
  %v1223 = vperm.slane %v1096, 7
  %v1224 = vperm.slane %v1098, 0
  %v1225 = vperm.slane %v1098, 1
  %v1226 = vperm.slane %v1098, 2
  %v1227 = vperm.slane %v1098, 3
  %v1228 = vperm.slane %v1098, 4
  %v1229 = vperm.slane %v1098, 5
  %v1230 = vperm.slane %v1098, 6
  %v1231 = vperm.slane %v1098, 7
  %v1232 = vperm.slane %v1100, 0
  %v1233 = vperm.slane %v1100, 1
  %v1234 = vperm.slane %v1100, 2
  %v1235 = vperm.slane %v1100, 3
  %v1236 = vperm.slane %v1100, 4
  %v1237 = vperm.slane %v1100, 5
  %v1238 = vperm.slane %v1100, 6
  %v1239 = vperm.slane %v1100, 7
  %v1240 = vperm.slane %v1102, 0
  %v1241 = vperm.slane %v1102, 1
  %v1242 = vperm.slane %v1102, 2
  %v1243 = vperm.slane %v1102, 3
  %v1244 = vperm.slane %v1102, 4
  %v1245 = vperm.slane %v1102, 5
  %v1246 = vperm.slane %v1102, 6
  %v1247 = vperm.slane %v1102, 7
  %1248 = vst [vmem:[#allocation1] ss:$9 sm:$0xff] %v1120
  %s1249 = scalar_lea.vmem [#allocation1], 1
  %1250 = vst [vmem:[%s1249] ss:$9 sm:$0xff] %v1121
  %s1251 = scalar_lea.vmem [#allocation1], 2
  %1252 = vst [vmem:[%s1251] ss:$9 sm:$0xff] %v1122
  %s1253 = scalar_lea.vmem [#allocation1], 3
  %1254 = vst [vmem:[%s1253] ss:$9 sm:$0xff] %v1123
  %s1255 = scalar_lea.vmem [#allocation1], 4
  %1256 = vst [vmem:[%s1255] ss:$9 sm:$0xff] %v1124
  %s1257 = scalar_lea.vmem [#allocation1], 5
  %1258 = vst [vmem:[%s1257] ss:$9 sm:$0xff] %v1125
  %s1259 = scalar_lea.vmem [#allocation1], 6
  %1260 = vst [vmem:[%s1259] ss:$9 sm:$0xff] %v1126
  %s1261 = scalar_lea.vmem [#allocation1], 7
  %1262 = vst [vmem:[%s1261] ss:$9 sm:$0xff] %v1127
  %v1263 = vld [vmem:[#allocation1] sm:$0xff]
  %1264 = vst [vmem:[#allocation1] ss:$9 sm:$0xff] %v1128
  %1265 = vst [vmem:[%s1249] ss:$9 sm:$0xff] %v1129
  %1266 = vst [vmem:[%s1251] ss:$9 sm:$0xff] %v1130
  %1267 = vst [vmem:[%s1253] ss:$9 sm:$0xff] %v1131
  %1268 = vst [vmem:[%s1255] ss:$9 sm:$0xff] %v1132
  %1269 = vst [vmem:[%s1257] ss:$9 sm:$0xff] %v1133
  %1270 = vst [vmem:[%s1259] ss:$9 sm:$0xff] %v1134
  %1271 = vst [vmem:[%s1261] ss:$9 sm:$0xff] %v1135
  %v1272 = vld [vmem:[#allocation1] sm:$0xff]
  %1273 = vst [vmem:[#allocation1] ss:$9 sm:$0xff] %v1136
  %1274 = vst [vmem:[%s1249] ss:$9 sm:$0xff] %v1137
  %1275 = vst [vmem:[%s1251] ss:$9 sm:$0xff] %v1138
  %1276 = vst [vmem:[%s1253] ss:$9 sm:$0xff] %v1139
  %1277 = vst [vmem:[%s1255] ss:$9 sm:$0xff] %v1140
  %1278 = vst [vmem:[%s1257] ss:$9 sm:$0xff] %v1141
  %1279 = vst [vmem:[%s1259] ss:$9 sm:$0xff] %v1142
  %1280 = vst [vmem:[%s1261] ss:$9 sm:$0xff] %v1143
  %v1281 = vld [vmem:[#allocation1] sm:$0xff]
  %1282 = vst [vmem:[#allocation1] ss:$9 sm:$0xff] %v1144
  %1283 = vst [vmem:[%s1249] ss:$9 sm:$0xff] %v1145
  %1284 = vst [vmem:[%s1251] ss:$9 sm:$0xff] %v1146
  %1285 = vst [vmem:[%s1253] ss:$9 sm:$0xff] %v1147
  %1286 = vst [vmem:[%s1255] ss:$9 sm:$0xff] %v1148
  %1287 = vst [vmem:[%s1257] ss:$9 sm:$0xff] %v1149
  %1288 = vst [vmem:[%s1259] ss:$9 sm:$0xff] %v1150
  %1289 = vst [vmem:[%s1261] ss:$9 sm:$0xff] %v1151
  %v1290 = vld [vmem:[#allocation1] sm:$0xff]
  %1291 = vst [vmem:[#allocation1] ss:$9 sm:$0xff] %v1152
  %1292 = vst [vmem:[%s1249] ss:$9 sm:$0xff] %v1153
  %1293 = vst [vmem:[%s1251] ss:$9 sm:$0xff] %v1154
  %1294 = vst [vmem:[%s1253] ss:$9 sm:$0xff] %v1155
  %1295 = vst [vmem:[%s1255] ss:$9 sm:$0xff] %v1156
  %1296 = vst [vmem:[%s1257] ss:$9 sm:$0xff] %v1157
  %1297 = vst [vmem:[%s1259] ss:$9 sm:$0xff] %v1158
  %1298 = vst [vmem:[%s1261] ss:$9 sm:$0xff] %v1159
  %v1299 = vld [vmem:[#allocation1] sm:$0xff]
  %1300 = vst [vmem:[#allocation1] ss:$9 sm:$0xff] %v1160
  %1301 = vst [vmem:[%s1249] ss:$9 sm:$0xff] %v1161
  %1302 = vst [vmem:[%s1251] ss:$9 sm:$0xff] %v1162
  %1303 = vst [vmem:[%s1253] ss:$9 sm:$0xff] %v1163
  %1304 = vst [vmem:[%s1255] ss:$9 sm:$0xff] %v1164
  %1305 = vst [vmem:[%s1257] ss:$9 sm:$0xff] %v1165
  %1306 = vst [vmem:[%s1259] ss:$9 sm:$0xff] %v1166
  %1307 = vst [vmem:[%s1261] ss:$9 sm:$0xff] %v1167
  %v1308 = vld [vmem:[#allocation1] sm:$0xff]
  %1309 = vst [vmem:[#allocation1] ss:$9 sm:$0xff] %v1168
  %1310 = vst [vmem:[%s1249] ss:$9 sm:$0xff] %v1169
  %1311 = vst [vmem:[%s1251] ss:$9 sm:$0xff] %v1170
  %1312 = vst [vmem:[%s1253] ss:$9 sm:$0xff] %v1171
  %1313 = vst [vmem:[%s1255] ss:$9 sm:$0xff] %v1172
  %1314 = vst [vmem:[%s1257] ss:$9 sm:$0xff] %v1173
  %1315 = vst [vmem:[%s1259] ss:$9 sm:$0xff] %v1174
  %1316 = vst [vmem:[%s1261] ss:$9 sm:$0xff] %v1175
  %v1317 = vld [vmem:[#allocation1] sm:$0xff]
  %1318 = vst [vmem:[#allocation1] ss:$9 sm:$0xff] %v1176
  %1319 = vst [vmem:[%s1249] ss:$9 sm:$0xff] %v1177
  %1320 = vst [vmem:[%s1251] ss:$9 sm:$0xff] %v1178
  %1321 = vst [vmem:[%s1253] ss:$9 sm:$0xff] %v1179
  %1322 = vst [vmem:[%s1255] ss:$9 sm:$0xff] %v1180
  %1323 = vst [vmem:[%s1257] ss:$9 sm:$0xff] %v1181
  %1324 = vst [vmem:[%s1259] ss:$9 sm:$0xff] %v1182
  %1325 = vst [vmem:[%s1261] ss:$9 sm:$0xff] %v1183
  %v1326 = vld [vmem:[#allocation1] sm:$0xff]
  %1327 = vst [vmem:[#allocation1] ss:$9 sm:$0xff] %v1184
  %1328 = vst [vmem:[%s1249] ss:$9 sm:$0xff] %v1185
  %1329 = vst [vmem:[%s1251] ss:$9 sm:$0xff] %v1186
  %1330 = vst [vmem:[%s1253] ss:$9 sm:$0xff] %v1187
  %1331 = vst [vmem:[%s1255] ss:$9 sm:$0xff] %v1188
  %1332 = vst [vmem:[%s1257] ss:$9 sm:$0xff] %v1189
  %1333 = vst [vmem:[%s1259] ss:$9 sm:$0xff] %v1190
  %1334 = vst [vmem:[%s1261] ss:$9 sm:$0xff] %v1191
  %v1335 = vld [vmem:[#allocation1] sm:$0xff]
  %1336 = vst [vmem:[#allocation1] ss:$9 sm:$0xff] %v1192
  %1337 = vst [vmem:[%s1249] ss:$9 sm:$0xff] %v1193
  %1338 = vst [vmem:[%s1251] ss:$9 sm:$0xff] %v1194
  %1339 = vst [vmem:[%s1253] ss:$9 sm:$0xff] %v1195
  %1340 = vst [vmem:[%s1255] ss:$9 sm:$0xff] %v1196
  %1341 = vst [vmem:[%s1257] ss:$9 sm:$0xff] %v1197
  %1342 = vst [vmem:[%s1259] ss:$9 sm:$0xff] %v1198
  %1343 = vst [vmem:[%s1261] ss:$9 sm:$0xff] %v1199
  %v1344 = vld [vmem:[#allocation1] sm:$0xff]
  %1345 = vst [vmem:[#allocation1] ss:$9 sm:$0xff] %v1200
  %1346 = vst [vmem:[%s1249] ss:$9 sm:$0xff] %v1201
  %1347 = vst [vmem:[%s1251] ss:$9 sm:$0xff] %v1202
  %1348 = vst [vmem:[%s1253] ss:$9 sm:$0xff] %v1203
  %1349 = vst [vmem:[%s1255] ss:$9 sm:$0xff] %v1204
  %1350 = vst [vmem:[%s1257] ss:$9 sm:$0xff] %v1205
  %1351 = vst [vmem:[%s1259] ss:$9 sm:$0xff] %v1206
  %1352 = vst [vmem:[%s1261] ss:$9 sm:$0xff] %v1207
  %v1353 = vld [vmem:[#allocation1] sm:$0xff]
  %1354 = vst [vmem:[#allocation1] ss:$9 sm:$0xff] %v1208
  %1355 = vst [vmem:[%s1249] ss:$9 sm:$0xff] %v1209
  %1356 = vst [vmem:[%s1251] ss:$9 sm:$0xff] %v1210
  %1357 = vst [vmem:[%s1253] ss:$9 sm:$0xff] %v1211
  %1358 = vst [vmem:[%s1255] ss:$9 sm:$0xff] %v1212
  %1359 = vst [vmem:[%s1257] ss:$9 sm:$0xff] %v1213
  %1360 = vst [vmem:[%s1259] ss:$9 sm:$0xff] %v1214
  %1361 = vst [vmem:[%s1261] ss:$9 sm:$0xff] %v1215
  %v1362 = vld [vmem:[#allocation1] sm:$0xff]
  %1363 = vst [vmem:[#allocation1] ss:$9 sm:$0xff] %v1216
  %1364 = vst [vmem:[%s1249] ss:$9 sm:$0xff] %v1217
  %1365 = vst [vmem:[%s1251] ss:$9 sm:$0xff] %v1218
  %1366 = vst [vmem:[%s1253] ss:$9 sm:$0xff] %v1219
  %1367 = vst [vmem:[%s1255] ss:$9 sm:$0xff] %v1220
  %1368 = vst [vmem:[%s1257] ss:$9 sm:$0xff] %v1221
  %1369 = vst [vmem:[%s1259] ss:$9 sm:$0xff] %v1222
  %1370 = vst [vmem:[%s1261] ss:$9 sm:$0xff] %v1223
  %v1371 = vld [vmem:[#allocation1] sm:$0xff]
  %1372 = vst [vmem:[#allocation1] ss:$9 sm:$0xff] %v1224
  %1373 = vst [vmem:[%s1249] ss:$9 sm:$0xff] %v1225
  %1374 = vst [vmem:[%s1251] ss:$9 sm:$0xff] %v1226
  %1375 = vst [vmem:[%s1253] ss:$9 sm:$0xff] %v1227
  %1376 = vst [vmem:[%s1255] ss:$9 sm:$0xff] %v1228
  %1377 = vst [vmem:[%s1257] ss:$9 sm:$0xff] %v1229
  %1378 = vst [vmem:[%s1259] ss:$9 sm:$0xff] %v1230
  %1379 = vst [vmem:[%s1261] ss:$9 sm:$0xff] %v1231
  %v1380 = vld [vmem:[#allocation1] sm:$0xff]
  %1381 = vst [vmem:[#allocation1] ss:$9 sm:$0xff] %v1232
  %1382 = vst [vmem:[%s1249] ss:$9 sm:$0xff] %v1233
  %1383 = vst [vmem:[%s1251] ss:$9 sm:$0xff] %v1234
  %1384 = vst [vmem:[%s1253] ss:$9 sm:$0xff] %v1235
  %1385 = vst [vmem:[%s1255] ss:$9 sm:$0xff] %v1236
  %1386 = vst [vmem:[%s1257] ss:$9 sm:$0xff] %v1237
  %1387 = vst [vmem:[%s1259] ss:$9 sm:$0xff] %v1238
  %1388 = vst [vmem:[%s1261] ss:$9 sm:$0xff] %v1239
  %v1389 = vld [vmem:[#allocation1] sm:$0xff]
  %1390 = vst [vmem:[#allocation1] ss:$9 sm:$0xff] %v1240
  %1391 = vst [vmem:[%s1249] ss:$9 sm:$0xff] %v1241
  %1392 = vst [vmem:[%s1251] ss:$9 sm:$0xff] %v1242
  %1393 = vst [vmem:[%s1253] ss:$9 sm:$0xff] %v1243
  %1394 = vst [vmem:[%s1255] ss:$9 sm:$0xff] %v1244
  %1395 = vst [vmem:[%s1257] ss:$9 sm:$0xff] %v1245
  %1396 = vst [vmem:[%s1259] ss:$9 sm:$0xff] %v1246
  %1397 = vst [vmem:[%s1261] ss:$9 sm:$0xff] %v1247
  %v1398 = vld [vmem:[#allocation1] sm:$0xff]
  %1399 = vset.pattern.permute.xlu0 0
  %1400 = vperm.xlu0 %1399, %v1263
  %v1401 = vpop.permute.xlu0 %1400
  %1402 = vset.pattern.permute.xlu0 0
  %1403 = vperm.xlu0 %1402, %v1272
  %v1404 = vpop.permute.xlu0 %1403
  %1405 = vset.pattern.permute.xlu0 0
  %1406 = vperm.xlu0 %1405, %v1281
  %v1407 = vpop.permute.xlu0 %1406
  %1408 = vset.pattern.permute.xlu0 0
  %1409 = vperm.xlu0 %1408, %v1290
  %v1410 = vpop.permute.xlu0 %1409
  %1411 = vset.pattern.permute.xlu0 0
  %1412 = vperm.xlu0 %1411, %v1299
  %v1413 = vpop.permute.xlu0 %1412
  %1414 = vset.pattern.permute.xlu0 0
  %1415 = vperm.xlu0 %1414, %v1308
  %v1416 = vpop.permute.xlu0 %1415
  %1417 = vset.pattern.permute.xlu0 0
  %1418 = vperm.xlu0 %1417, %v1317
  %v1419 = vpop.permute.xlu0 %1418
  %1420 = vset.pattern.permute.xlu0 0
  %1421 = vperm.xlu0 %1420, %v1326
  %v1422 = vpop.permute.xlu0 %1421
  %1423 = vset.pattern.permute.xlu0 0
  %1424 = vperm.xlu0 %1423, %v1335
  %v1425 = vpop.permute.xlu0 %1424
  %1426 = vset.pattern.permute.xlu0 0
  %1427 = vperm.xlu0 %1426, %v1344
  %v1428 = vpop.permute.xlu0 %1427
  %1429 = vset.pattern.permute.xlu0 0
  %1430 = vperm.xlu0 %1429, %v1353
  %v1431 = vpop.permute.xlu0 %1430
  %1432 = vset.pattern.permute.xlu0 0
  %1433 = vperm.xlu0 %1432, %v1362
  %v1434 = vpop.permute.xlu0 %1433
  %1435 = vset.pattern.permute.xlu0 0
  %1436 = vperm.xlu0 %1435, %v1371
  %v1437 = vpop.permute.xlu0 %1436
  %1438 = vset.pattern.permute.xlu0 0
  %1439 = vperm.xlu0 %1438, %v1380
  %v1440 = vpop.permute.xlu0 %1439
  %1441 = vset.pattern.permute.xlu0 0
  %1442 = vperm.xlu0 %1441, %v1389
  %v1443 = vpop.permute.xlu0 %1442
  %1444 = vset.pattern.permute.xlu0 0
  %1445 = vperm.xlu0 %1444, %v1398
  %v1446 = vpop.permute.xlu0 %1445
  %v1447 = vlaneseq
  %v1448 = vand.u32 %v1447, 127
  %v1449 = vperm.slane %v1401, %v1448
  %v1450 = vadd.s32 %v1448, 4294967288
  %v1451 = vperm.slane %v1404, %v1450
  %vm1452 = vcmask 130112
  %v1453 = vsel %vm1452, %v1451, %v1449
  %v1454 = vadd.s32 %v1448, 4294967280
  %v1455 = vperm.slane %v1407, %v1454
  %vm1456 = vcmask 195712
  %v1457 = vsel %vm1456, %v1455, %v1453
  %v1458 = vadd.s32 %v1448, 4294967272
  %v1459 = vperm.slane %v1410, %v1458
  %vm1460 = vcmask 261312
  %v1461 = vsel %vm1460, %v1459, %v1457
  %v1462 = vadd.s32 %v1448, 4294967264
  %v1463 = vperm.slane %v1413, %v1462
  %vm1464 = vcmask 326912
  %v1465 = vsel %vm1464, %v1463, %v1461
  %v1466 = vadd.s32 %v1448, 4294967256
  %v1467 = vperm.slane %v1416, %v1466
  %vm1468 = vcmask 392512
  %v1469 = vsel %vm1468, %v1467, %v1465
  %v1470 = vadd.s32 %v1448, 4294967248
  %v1471 = vperm.slane %v1419, %v1470
  %vm1472 = vcmask 458112
  %v1473 = vsel %vm1472, %v1471, %v1469
  %v1474 = vadd.s32 %v1448, 4294967240
  %v1475 = vperm.slane %v1422, %v1474
  %vm1476 = vcmask 523712
  %v1477 = vsel %vm1476, %v1475, %v1473
  %v1478 = vadd.s32 %v1448, 4294967232
  %v1479 = vperm.slane %v1425, %v1478
  %vm1480 = vcmask 589312
  %v1481 = vsel %vm1480, %v1479, %v1477
  %v1482 = vadd.s32 %v1448, 4294967224
  %v1483 = vperm.slane %v1428, %v1482
  %vm1484 = vcmask 654912
  %v1485 = vsel %vm1484, %v1483, %v1481
  %v1486 = vadd.s32 %v1448, 4294967216
  %v1487 = vperm.slane %v1431, %v1486
  %vm1488 = vcmask 720512
  %v1489 = vsel %vm1488, %v1487, %v1485
  %v1490 = vadd.s32 %v1448, 4294967208
  %v1491 = vperm.slane %v1434, %v1490
  %vm1492 = vcmask 786112
  %v1493 = vsel %vm1492, %v1491, %v1489
  %v1494 = vadd.s32 %v1448, 4294967200
  %v1495 = vperm.slane %v1437, %v1494
  %vm1496 = vcmask 851712
  %v1497 = vsel %vm1496, %v1495, %v1493
  %v1498 = vadd.s32 %v1448, 4294967192
  %v1499 = vperm.slane %v1440, %v1498
  %vm1500 = vcmask 917312
  %v1501 = vsel %vm1500, %v1499, %v1497
  %v1502 = vadd.s32 %v1448, 4294967184
  %v1503 = vperm.slane %v1443, %v1502
  %vm1504 = vcmask 982912
  %v1505 = vsel %vm1504, %v1503, %v1501
  %v1506 = vadd.s32 %v1448, 4294967176
  %v1507 = vperm.slane %v1446, %v1506
  %vm1508 = vcmask 1048512
  %v1509 = vsel %vm1508, %v1507, %v1505
  %v1511 = vadd.f32 %v1103, %v1509
  %1512 = vst [vmem:[#allocation2] sm:$0x1] %v1511
  // Predicated region
  $region30: #{kge_neg_sampling_loss.1} parent=0 // pred_check
    %p1513 = pneg %p74
  $region31: #{kge_neg_sampling_loss.1} parent=0 // pred_check_branch
    %1515 = sbr.rel (%p1513) target = $region33
  $region32: #{kge_neg_sampling_loss.1} parent=0 // pred_region
    %v1516 = vld [vmem:[#allocation2] sm:$0x1]
    %1517 = vst [vmem:[%s6] sm:$0x1] %v1516
  $region33: #{kge_neg_sampling_loss.1} parent=0 // pred_fallthru
    _
  // Predicated region
  $region34: #{kge_neg_sampling_loss.1} parent=0 // pred_check
    _
  $region35: #{kge_neg_sampling_loss.1} parent=0 // pred_check_branch
    %1519 = sbr.rel (0) target = $region37
  $region36: #{kge_neg_sampling_loss.1} parent=0 // pred_region
    _
  $region37: #{kge_neg_sampling_loss.1} parent=0 // pred_fallthru
    _
  // Predicated region
  $region38: #{kge_neg_sampling_loss.1} parent=0 // pred_check
    _
  $region39: #{kge_neg_sampling_loss.1} parent=0 // pred_check_branch
    %1521 = sbr.rel (0) target = $region41
  $region40: #{kge_neg_sampling_loss.1} parent=0 // pred_region
    _
  $region41: #{kge_neg_sampling_loss.1} parent=0 // pred_fallthru
    _

</llo_original>
